<compile_context>
chip_gen: v7x
topology: tpu7x:2x2x1
jax: 0.10.0
libtpu: 0.0.40
codegen_flags: <defaults>
</compile_context>

<pallas_src>
import math
import jax
import jax.numpy as jnp
from jax.experimental import pallas as pl
from jax.experimental.pallas import tpu as pltpu

IMG_SIZE = 256

# ---- small synthetic dims consistent with the reference module ----
BS = 2
GF_DIM = 32                  # global_feature_dim
GCN_IN_DIM = (32, 16, 16)
GCN_OUT_DIM = (16, 16, 8)
V_MANO = 50                  # vertex_num (MANO verts, synthetic small)
# reversed coarsen_graphs_L vertex counts: [V_IN, 16, V_OUT, V_ALL]
V_IN = 8
V_OUT = 32
V_ALL = 64

D_GF_OUT = GCN_IN_DIM[0] - 3          # 29
C_OUT = GCN_OUT_DIM[-1]               # 8
ROWS = 1 + V_OUT + V_MANO             # 83 (params row + V_OUT verts + MANO verts)
ROWS_PAD = 88                         # next multiple of 8 -> unmasked sublane tiling
LANES = 128                           # lane-dense output slab width

# ---- packed parameter slab layout: (PROW, LANES) f32 ----
PROW = 128
_R_GFW = 0     # rows 0:32  : gf W^T (left lanes 0:29, right lanes 32:61); W_pc lanes 64:70
_R_AFF = 32    # rows 32:40 : r32 bias, r33 gamma, r34 beta (left 0:29 / right 32:61)
#                             r35 lanes 0:6 = b_pc
#                             lane 64 rows 32:40 = avg_rep column
#                             lanes 72:75 = pe_left, lanes 80:83 = pe_right
_R_REP = 40    # rows 40:122: rep_all (V_OUT+V_MANO, V_IN) in lanes 0:8
_L_RIGHT = 32
_L_WPC = 64
_L_AVG = 64
_L_PE = 72


# ----------------------------- fused Pallas kernel -----------------------------

def _decoder_kernel(p_ref, x_ref, out_ref):
    # Zero-fill the whole lane-dense output once (full unmasked store); payload
    # below lands in lanes 0:5 via narrow masked stores.
    out_ref[...] = jnp.zeros_like(out_ref)

    x = x_ref[...]                                                      # (BS, GF_DIM)

    # gf_layer Linear for BOTH hands in one MXU dot: lanes 0:29 left, 32:61 right
    w_gf = p_ref[_R_GFW:_R_GFW + GF_DIM, 0:2 * _L_RIGHT]                # (32, 64)
    y_both = jnp.dot(x, w_gf, preferred_element_type=jnp.float32)       # (BS, 64)

    w_pc = p_ref[_R_GFW:_R_GFW + GF_DIM, _L_WPC:_L_WPC + 6]             # (32, 6)
    b_pc = p_ref[_R_AFF + 3:_R_AFF + 4, 0:6]                            # (1, 6)
    avg_c = p_ref[_R_AFF:_R_AFF + V_IN, _L_AVG:_L_AVG + 1]              # (V_IN, 1)
    rep_all = p_ref[_R_REP:_R_REP + V_OUT + V_MANO, 0:V_IN]             # (82, 8)

    for h in range(2):                                                  # static unroll: hands
        lo = h * _L_RIGHT
        # gf_layer: bias + LayerNorm(eps=1e-6) with affine
        y = y_both[:, lo:lo + D_GF_OUT] + p_ref[_R_AFF:_R_AFF + 1, lo:lo + D_GF_OUT]
        mu = jnp.mean(y, axis=-1, keepdims=True)
        var = jnp.mean(jnp.square(y - mu), axis=-1, keepdims=True)
        gf = ((y - mu) * jax.lax.rsqrt(var + 1e-6)
              * p_ref[_R_AFF + 1:_R_AFF + 2, lo:lo + D_GF_OUT]
              + p_ref[_R_AFF + 2:_R_AFF + 3, lo:lo + D_GF_OUT])         # (BS, 29)

        pe_h = p_ref[_R_AFF:_R_AFF + V_IN, _L_PE + 8 * h:_L_PE + 8 * h + 3]   # (V_IN, 3)

        for b in range(BS):                                             # static unroll: batch
            # concat(global feature broadcast over vertices, positional encoding)
            f_b = jnp.concatenate(
                [jnp.broadcast_to(gf[b:b + 1, :], (V_IN, D_GF_OUT)), pe_h], axis=-1)  # (8, 32)

            # avg_head folded through the nearest-upsample: VPU mul + sublane reduce
            af = jnp.sum(avg_c * f_b, axis=0, keepdims=True)                          # (1, 32)

            # fused (dual-placeholder -> params_head | dual-placeholder -> coord_head)
            big_in = jnp.concatenate([af, f_b], axis=0)                               # (9, 32)
            big = jnp.dot(big_in, w_pc, preferred_element_type=jnp.float32) + b_pc    # (9, 6)
            prm = big[0:1, 0:3]                                                       # (1, 3)
            v3s = big[1:, 3:6]                                                        # (V_IN, 3)

            # [nearest V_IN->V_OUT upsample ; unsample_layer o upsample] in ONE dot
            both3d = jnp.dot(rep_all, v3s, preferred_element_type=jnp.float32)        # (82, 3)

            # projection_batch (orthographic)
            scale = prm[0:1, 0:1] * IMG_SIZE                                          # (1, 1)
            trans = prm[0:1, 1:3] * (IMG_SIZE / 2.0) + IMG_SIZE / 2.0                 # (1, 2)
            both2d = scale * both3d[:, 0:2] + trans                                   # (82, 2)

            # narrow masked stores into the pre-zeroed lane-dense tile
            out_ref[h, b, 0:1, 0:3] = prm
            out_ref[h, b, 1:1 + V_OUT + V_MANO, 0:3] = both3d
            out_ref[h, b, 1:1 + V_OUT + V_MANO, 3:5] = both2d


def decoder_fused(param_slab, x):
    return pl.pallas_call(
        _decoder_kernel,
        out_shape=jax.ShapeDtypeStruct((2, BS, ROWS_PAD, LANES), jnp.float32),
        in_specs=[pl.BlockSpec(memory_space=pltpu.MemorySpace.VMEM),
                  pl.BlockSpec(memory_space=pltpu.MemorySpace.VMEM)],
        out_specs=pl.BlockSpec(memory_space=pltpu.MemorySpace.VMEM),
    )(param_slab, x)


# ----------------------------- one-time prepare step -----------------------------

def _vert_to_GCN_1(x, graph_perm):
    # (V_MANO, C) -> (V_ALL, C); padded "fake" graph nodes (index >= V_MANO) are zero
    Vm, C = x.shape
    x_pad = jnp.concatenate([x, jnp.zeros((1, C), x.dtype)], axis=0)
    idx = jnp.where(graph_perm < Vm, graph_perm, Vm)
    return x_pad[idx, :]


def _graph_avg_pool_1(x, pfac):
    if pfac <= 1:
        return x
    V, C = x.shape
    return x.reshape(V // pfac, pfac, C).mean(axis=1)


def prepare_decoder_constants(p):
    """One-time parameter packing + buffer-only transforms, hoisted out of forward."""
    # nearest V_IN -> V_OUT replication matrix (repeat-then-project == project-then-repeat)
    rep = jnp.repeat(jnp.eye(V_IN, dtype=jnp.float32), V_OUT // V_IN, axis=0)   # (V_OUT, V_IN)
    dual_wT = p['dual_w'].T                                                     # (32, 8)

    # fold the (linear) DualGraph placeholder into the params / coord heads
    W_prm = dual_wT @ p['params_w'].T                                           # (32, 3)
    W_v3 = dual_wT @ p['coord_w'].T                                             # (32, 3)
    W_pc = jnp.concatenate([W_prm, W_v3], axis=1)                               # (32, 6)

    avg_rep = p['avg_w'] @ rep                                                  # (1, V_IN)
    s = jnp.sum(avg_rep)
    b_prm = (s * p['dual_b'] + p['avg_b']) @ p['params_w'].T + p['params_b']    # (1, 3)
    b_v3 = p['dual_b'] @ p['coord_w'].T + p['coord_b']                          # (1, 3)
    b_pc = jnp.concatenate([b_prm, b_v3], axis=1)                               # (1, 6)

    # [nearest upsample ; unsample_layer o nearest upsample] stacked
    rep_all = jnp.concatenate([rep, p['up_w'] @ rep], axis=0)                   # (82, V_IN)

    # get_hand_pe: depends only on registered buffers -> identical for every batch
    # element and every call, so it is computed once here (semantically equivalent).
    dc = p['dense_coor'] * 2.0 - 1.0                                            # (V_MANO, 3)
    pfac = V_ALL // V_IN
    pe = {ht: _graph_avg_pool_1(_vert_to_GCN_1(dc, p[f'graph_perm_{ht}']), pfac)
          for ht in ['left', 'right']}                                          # (V_IN, 3) each

    slab = jnp.zeros((PROW, LANES), jnp.float32)
    slab = slab.at[_R_GFW:_R_GFW + GF_DIM, 0:D_GF_OUT].set(p['gf_left_w'].T)
    slab = slab.at[_R_GFW:_R_GFW + GF_DIM, _L_RIGHT:_L_RIGHT + D_GF_OUT].set(p['gf_right_w'].T)
    slab = slab.at[_R_GFW:_R_GFW + GF_DIM, _L_WPC:_L_WPC + 6].set(W_pc)
    slab = slab.at[_R_AFF, 0:D_GF_OUT].set(p['gf_left_b'][0])
    slab = slab.at[_R_AFF + 1, 0:D_GF_OUT].set(p['gf_left_gamma'][0])
    slab = slab.at[_R_AFF + 2, 0:D_GF_OUT].set(p['gf_left_beta'][0])
    slab = slab.at[_R_AFF, _L_RIGHT:_L_RIGHT + D_GF_OUT].set(p['gf_right_b'][0])
    slab = slab.at[_R_AFF + 1, _L_RIGHT:_L_RIGHT + D_GF_OUT].set(p['gf_right_gamma'][0])
    slab = slab.at[_R_AFF + 2, _L_RIGHT:_L_RIGHT + D_GF_OUT].set(p['gf_right_beta'][0])
    slab = slab.at[_R_AFF + 3, 0:6].set(b_pc[0])
    slab = slab.at[_R_AFF:_R_AFF + V_IN, _L_AVG].set(avg_rep[0])
    slab = slab.at[_R_AFF:_R_AFF + V_IN, _L_PE:_L_PE + 3].set(pe['left'])
    slab = slab.at[_R_AFF:_R_AFF + V_IN, _L_PE + 8:_L_PE + 8 + 3].set(pe['right'])
    slab = slab.at[_R_REP:_R_REP + V_OUT + V_MANO, 0:V_IN].set(rep_all)
    return {'slab': slab}


# ----------------------------- JAX glue (graph utils) -----------------------------

def GCN_to_vert(x, graph_perm_reverse):
    return x[:, graph_perm_reverse[:V_MANO], :]


def graph_upsample(x, pfac):
    if pfac <= 1:
        return x
    return jnp.repeat(x, pfac, axis=1)


# ----------------------------- parameters -----------------------------

def _xavier(key, out_dim, in_dim):
    bound = math.sqrt(6.0 / (in_dim + out_dim))
    return jax.random.uniform(key, (out_dim, in_dim), jnp.float32, -bound, bound)


def init_params(key):
    keys = jax.random.split(key, 10)
    d_gf_out = D_GF_OUT
    p = {}
    p['gf_left_w'] = _xavier(keys[0], d_gf_out, GF_DIM)
    p['gf_left_b'] = jnp.zeros((1, d_gf_out), jnp.float32)
    p['gf_left_gamma'] = jnp.ones((1, d_gf_out), jnp.float32)
    p['gf_left_beta'] = jnp.zeros((1, d_gf_out), jnp.float32)
    p['gf_right_w'] = _xavier(keys[1], d_gf_out, GF_DIM)
    p['gf_right_b'] = jnp.zeros((1, d_gf_out), jnp.float32)
    p['gf_right_gamma'] = jnp.ones((1, d_gf_out), jnp.float32)
    p['gf_right_beta'] = jnp.zeros((1, d_gf_out), jnp.float32)
    # placeholder DualGraph projection (gcn_in_dim[0] -> gcn_out_dim[-1])
    p['dual_w'] = _xavier(keys[2], GCN_OUT_DIM[-1], GCN_IN_DIM[0])
    p['dual_b'] = jnp.zeros((1, GCN_OUT_DIM[-1]), jnp.float32)
    # heads (shared between the two hands, exactly as in the reference module)
    p['avg_w'] = _xavier(keys[3], 1, V_OUT)               # avg_head: Linear(V_OUT, 1)
    p['avg_b'] = jnp.zeros((1, 1), jnp.float32)
    p['params_w'] = _xavier(keys[4], 3, GCN_OUT_DIM[-1])  # params_head
    p['params_b'] = jnp.zeros((1, 3), jnp.float32)
    p['coord_w'] = _xavier(keys[5], 3, GCN_OUT_DIM[-1])   # coord_head
    p['coord_b'] = jnp.zeros((1, 3), jnp.float32)
    p['up_w'] = _xavier(keys[6], V_MANO, V_OUT)           # unsample_layer (no bias)
    # buffers / graph bookkeeping (synthetic deterministic coarsening permutations)
    p['dense_coor'] = jax.random.uniform(keys[7], (V_MANO, 3), jnp.float32)
    for i, ht in enumerate(['left', 'right']):
        perm = jax.random.permutation(keys[8 + i], V_ALL).astype(jnp.int32)
        p[f'graph_perm_{ht}'] = perm
        p[f'graph_perm_reverse_{ht}'] = jnp.argsort(perm).astype(jnp.int32)
    return p


# ----------------------------- decoder forward -----------------------------

def decoder_forward(p, consts, x, fmaps):
    assert x.shape == (BS, GF_DIM)
    fmaps = fmaps[:-1]   # last feature map is dropped, as in the reference forward
    del fmaps            # TODO(synk): consumed only by the (unavailable) real DualGraph

    # single fused kernel: both hands, both batch elements, one launch
    out = decoder_fused(consts['slab'], x)               # (2, BS, 88, 128)

    # unpack the lane-dense slab (free layout plumbing; rows 83:88 are padding)
    prm = out[:, :, 0, 0:3]                              # (2, BS, 3)
    v3d = out[:, :, 1:1 + V_OUT, 0:3]                    # (2, BS, V_OUT, 3)
    v2d = out[:, :, 1:1 + V_OUT, 3:5]                    # (2, BS, V_OUT, 2)
    m3d = out[:, :, 1 + V_OUT:1 + V_OUT + V_MANO, 0:3]   # (2, BS, V_MANO, 3)
    m2d = out[:, :, 1 + V_OUT:1 + V_OUT + V_MANO, 3:5]   # (2, BS, V_MANO, 2)

    hands = {'left': 0, 'right': 1}
    scale = {ht: prm[i, :, 0] for ht, i in hands.items()}
    trans2d = {ht: prm[i, :, 1:] for ht, i in hands.items()}
    paramsDict = {'scale': scale, 'trans2d': trans2d}

    verts3d = {ht: v3d[i] for ht, i in hands.items()}
    verts2d = {ht: v2d[i] for ht, i in hands.items()}
    handDictList = [{'verts3d': verts3d, 'verts2d': verts2d}]

    result = {'verts3d': {ht: m3d[i] for ht, i in hands.items()},
              'verts2d': {ht: m2d[i] for ht, i in hands.items()}}

    otherInfo = {'verts3d_MANO_list': {'left': [], 'right': []},
                 'verts2d_MANO_list': {'left': [], 'right': []}}
    for i in range(len(handDictList)):
        for ht in ['left', 'right']:
            rev = p[f'graph_perm_reverse_{ht}']
            v = handDictList[i]['verts3d'][ht]
            v = graph_upsample(v, V_ALL // v.shape[1])
            otherInfo['verts3d_MANO_list'][ht].append(GCN_to_vert(v, rev))
            v = handDictList[i]['verts2d'][ht]
            v = graph_upsample(v, V_ALL // v.shape[1])
            otherInfo['verts2d_MANO_list'][ht].append(GCN_to_vert(v, rev))

    return result, paramsDict, handDictList, otherInfo


if __name__ == "__main__":
    key = jax.random.PRNGKey(0)
    pkey, xkey, f0, f1, f2, f3 = jax.random.split(key, 6)
    params = init_params(pkey)
    consts = prepare_decoder_constants(params)   # one-time packing (hoisted out of forward)
    x = jax.random.normal(xkey, (BS, GF_DIM), jnp.float32)
    # fmaps in NCHW; the reference forward drops the last one before DualGraph.
    fmaps = [
        jax.random.normal(f0, (BS, 8, 8, 8), jnp.float32),
        jax.random.normal(f1, (BS, 8, 16, 16), jnp.float32),
        jax.random.normal(f2, (BS, 8, 32, 32), jnp.float32),
        jax.random.normal(f3, (BS, 8, 64, 64), jnp.float32),
    ]
    out = decoder_forward(params, consts, x, fmaps)
    jax.block_until_ready(out)
    print("KERNEL_OK")
</pallas_src>

<mosaic_0001>
module attributes {stable_mosaic.version = 11 : i64} {
  func.func @_decoder_kernel(%arg0: memref<128x128xf32, #tpu.memory_space<vmem>>, %arg1: memref<2x32xf32, #tpu.memory_space<vmem>>, %arg2: memref<2x2x88x128xf32, #tpu.memory_space<vmem>>) attributes {dimension_semantics = [], scalar_prefetch = 0 : i64, scratch_operands = 0 : i64, tpu.core_type = #tpu.core_type<tc>} {
    %cst = arith.constant 0.000000e+00 : f32
    %0 = vector.broadcast %cst : f32 to vector<2x2x88x128xf32>
    %c0 = arith.constant 0 : index
    %c0_0 = arith.constant 0 : index
    %c0_1 = arith.constant 0 : index
    %c0_2 = arith.constant 0 : index
    %1 = vector.load %arg2[%c0, %c0_0, %c0_1, %c0_2] : memref<2x2x88x128xf32, #tpu.memory_space<vmem>>, vector<2x2x88x128xf32>
    tpu.vector_store %arg2[%c0, %c0_0, %c0_1, %c0_2], %0 {strides = array<i32>} : memref<2x2x88x128xf32, #tpu.memory_space<vmem>>, vector<2x2x88x128xf32>,
    %c0_3 = arith.constant 0 : index
    %c0_4 = arith.constant 0 : index
    %2 = vector.load %arg1[%c0_3, %c0_4] : memref<2x32xf32, #tpu.memory_space<vmem>>, vector<2x32xf32>
    %c0_5 = arith.constant 0 : index
    %c0_6 = arith.constant 0 : index
    %3 = vector.load %arg0[%c0_5, %c0_6] : memref<128x128xf32, #tpu.memory_space<vmem>>, vector<32x64xf32>
    %cst_7 = arith.constant dense<0.000000e+00> : vector<2x64xf32>
    %4 = tpu.matmul %2, %3, %cst_7 {dimension_numbers = #tpu.dot_dimension_numbers<[1], [0], [0], [1], [0, 0, 1, 1], [], []>} : vector<2x32xf32>, vector<32x64xf32>, vector<2x64xf32> -> vector<2x64xf32>
    %c0_8 = arith.constant 0 : index
    %c64 = arith.constant 64 : index
    %5 = vector.load %arg0[%c0_8, %c64] : memref<128x128xf32, #tpu.memory_space<vmem>>, vector<32x6xf32>
    %c35 = arith.constant 35 : index
    %c0_9 = arith.constant 0 : index
    %6 = vector.load %arg0[%c35, %c0_9] : memref<128x128xf32, #tpu.memory_space<vmem>>, vector<1x6xf32>
    %c32 = arith.constant 32 : index
    %c64_10 = arith.constant 64 : index
    %7 = vector.load %arg0[%c32, %c64_10] : memref<128x128xf32, #tpu.memory_space<vmem>>, vector<8x1xf32>
    %c40 = arith.constant 40 : index
    %c0_11 = arith.constant 0 : index
    %8 = vector.load %arg0[%c40, %c0_11] : memref<128x128xf32, #tpu.memory_space<vmem>>, vector<82x8xf32>
    %9 = vector.extract_strided_slice %4 {offsets = [0, 0], sizes = [2, 29], strides = [1, 1]} : vector<2x64xf32> to vector<2x29xf32>
    %c32_12 = arith.constant 32 : index
    %c0_13 = arith.constant 0 : index
    %10 = vector.load %arg0[%c32_12, %c0_13] : memref<128x128xf32, #tpu.memory_space<vmem>>, vector<1x29xf32>
    %11 = vector.broadcast %10 : vector<1x29xf32> to vector<2x29xf32>
    %12 = arith.addf %9, %11 : vector<2x29xf32>
    %cst_14 = arith.constant dense<0.000000e+00> : vector<2xf32>
    %13 = vector.multi_reduction <add>, %12, %cst_14 [1] : vector<2x29xf32> to vector<2xf32>
    %14 = vector.shape_cast %13 : vector<2xf32> to vector<2x1xf32>
    %cst_15 = arith.constant 2.900000e+01 : f32
    %15 = vector.broadcast %cst_15 : f32 to vector<2x1xf32>
    %16 = arith.divf %14, %15 : vector<2x1xf32>
    %17 = vector.broadcast %16 : vector<2x1xf32> to vector<2x29xf32>
    %18 = arith.subf %12, %17 : vector<2x29xf32>
    %19 = arith.mulf %18, %18 : vector<2x29xf32>
    %cst_16 = arith.constant dense<0.000000e+00> : vector<2xf32>
    %20 = vector.multi_reduction <add>, %19, %cst_16 [1] : vector<2x29xf32> to vector<2xf32>
    %21 = vector.shape_cast %20 : vector<2xf32> to vector<2x1xf32>
    %cst_17 = arith.constant 2.900000e+01 : f32
    %22 = vector.broadcast %cst_17 : f32 to vector<2x1xf32>
    %23 = arith.divf %21, %22 : vector<2x1xf32>
    %24 = vector.broadcast %16 : vector<2x1xf32> to vector<2x29xf32>
    %25 = arith.subf %12, %24 : vector<2x29xf32>
    %cst_18 = arith.constant 9.99999997E-7 : f32
    %26 = vector.broadcast %cst_18 : f32 to vector<2x1xf32>
    %27 = arith.addf %23, %26 : vector<2x1xf32>
    %28 = math.rsqrt %27 : vector<2x1xf32>
    %29 = vector.broadcast %28 : vector<2x1xf32> to vector<2x29xf32>
    %30 = arith.mulf %25, %29 : vector<2x29xf32>
    %c33 = arith.constant 33 : index
    %c0_19 = arith.constant 0 : index
    %31 = vector.load %arg0[%c33, %c0_19] : memref<128x128xf32, #tpu.memory_space<vmem>>, vector<1x29xf32>
    %32 = vector.broadcast %31 : vector<1x29xf32> to vector<2x29xf32>
    %33 = arith.mulf %30, %32 : vector<2x29xf32>
    %c34 = arith.constant 34 : index
    %c0_20 = arith.constant 0 : index
    %34 = vector.load %arg0[%c34, %c0_20] : memref<128x128xf32, #tpu.memory_space<vmem>>, vector<1x29xf32>
    %35 = vector.broadcast %34 : vector<1x29xf32> to vector<2x29xf32>
    %36 = arith.addf %33, %35 : vector<2x29xf32>
    %c32_21 = arith.constant 32 : index
    %c72 = arith.constant 72 : index
    %37 = vector.load %arg0[%c32_21, %c72] : memref<128x128xf32, #tpu.memory_space<vmem>>, vector<8x3xf32>
    %38 = vector.extract_strided_slice %36 {offsets = [0, 0], sizes = [1, 29], strides = [1, 1]} : vector<2x29xf32> to vector<1x29xf32>
    %39 = vector.shape_cast %38 : vector<1x29xf32> to vector<1x29xf32>
    %40 = vector.broadcast %39 : vector<1x29xf32> to vector<8x29xf32>
    %41 = tpu.concatenate %40, %37 in 1 : vector<8x29xf32>, vector<8x3xf32> -> vector<8x32xf32>
    %42 = vector.broadcast %7 : vector<8x1xf32> to vector<8x32xf32>
    %43 = arith.mulf %42, %41 : vector<8x32xf32>
    %cst_22 = arith.constant dense<0.000000e+00> : vector<32xf32>
    %44 = vector.multi_reduction <add>, %43, %cst_22 [0] : vector<8x32xf32> to vector<32xf32>
    %45 = vector.shape_cast %44 : vector<32xf32> to vector<1x32xf32>
    %46 = tpu.concatenate %45, %41 in 0 : vector<1x32xf32>, vector<8x32xf32> -> vector<9x32xf32>
    %cst_23 = arith.constant dense<0.000000e+00> : vector<9x6xf32>
    %47 = tpu.matmul %46, %5, %cst_23 {dimension_numbers = #tpu.dot_dimension_numbers<[1], [0], [0], [1], [0, 0, 1, 1], [], []>} : vector<9x32xf32>, vector<32x6xf32>, vector<9x6xf32> -> vector<9x6xf32>
    %48 = vector.broadcast %6 : vector<1x6xf32> to vector<9x6xf32>
    %49 = arith.addf %47, %48 : vector<9x6xf32>
    %50 = vector.extract_strided_slice %49 {offsets = [0, 0], sizes = [1, 3], strides = [1, 1]} : vector<9x6xf32> to vector<1x3xf32>
    %51 = vector.extract_strided_slice %49 {offsets = [1, 3], sizes = [8, 3], strides = [1, 1]} : vector<9x6xf32> to vector<8x3xf32>
    %cst_24 = arith.constant dense<0.000000e+00> : vector<82x3xf32>
    %52 = tpu.matmul %8, %51, %cst_24 {dimension_numbers = #tpu.dot_dimension_numbers<[1], [0], [0], [1], [0, 0, 1, 1], [], []>} : vector<82x8xf32>, vector<8x3xf32>, vector<82x3xf32> -> vector<82x3xf32>
    %53 = vector.extract_strided_slice %50 {offsets = [0, 0], sizes = [1, 1], strides = [1, 1]} : vector<1x3xf32> to vector<1x1xf32>
    %cst_25 = arith.constant 2.560000e+02 : f32
    %54 = vector.broadcast %cst_25 : f32 to vector<1x1xf32>
    %55 = arith.mulf %53, %54 : vector<1x1xf32>
    %56 = vector.extract_strided_slice %50 {offsets = [0, 1], sizes = [1, 2], strides = [1, 1]} : vector<1x3xf32> to vector<1x2xf32>
    %cst_26 = arith.constant 1.280000e+02 : f32
    %57 = vector.broadcast %cst_26 : f32 to vector<1x2xf32>
    %58 = arith.mulf %56, %57 : vector<1x2xf32>
    %cst_27 = arith.constant 1.280000e+02 : f32
    %59 = vector.broadcast %cst_27 : f32 to vector<1x2xf32>
    %60 = arith.addf %58, %59 : vector<1x2xf32>
    %61 = vector.extract_strided_slice %52 {offsets = [0, 0], sizes = [82, 2], strides = [1, 1]} : vector<82x3xf32> to vector<82x2xf32>
    %62 = vector.broadcast %55 : vector<1x1xf32> to vector<82x2xf32>
    %63 = arith.mulf %62, %61 : vector<82x2xf32>
    %64 = vector.broadcast %60 : vector<1x2xf32> to vector<82x2xf32>
    %65 = arith.addf %63, %64 : vector<82x2xf32>
    %c0_28 = arith.constant 0 : index
    %c0_29 = arith.constant 0 : index
    %c0_30 = arith.constant 0 : index
    %c0_31 = arith.constant 0 : index
    %66 = vector.load %arg2[%c0_28, %c0_29, %c0_30, %c0_31] : memref<2x2x88x128xf32, #tpu.memory_space<vmem>>, vector<1x1x1x3xf32>
    %67 = vector.shape_cast %66 : vector<1x1x1x3xf32> to vector<1x3xf32>
    %68 = vector.shape_cast %50 : vector<1x3xf32> to vector<1x1x1x3xf32>
    tpu.vector_store %arg2[%c0_28, %c0_29, %c0_30, %c0_31], %68 {strides = array<i32>} : memref<2x2x88x128xf32, #tpu.memory_space<vmem>>, vector<1x1x1x3xf32>,
    %c0_32 = arith.constant 0 : index
    %c0_33 = arith.constant 0 : index
    %c1 = arith.constant 1 : index
    %c0_34 = arith.constant 0 : index
    %69 = vector.load %arg2[%c0_32, %c0_33, %c1, %c0_34] : memref<2x2x88x128xf32, #tpu.memory_space<vmem>>, vector<1x1x82x3xf32>
    %70 = vector.shape_cast %69 : vector<1x1x82x3xf32> to vector<82x3xf32>
    %71 = vector.shape_cast %52 : vector<82x3xf32> to vector<1x1x82x3xf32>
    tpu.vector_store %arg2[%c0_32, %c0_33, %c1, %c0_34], %71 {strides = array<i32>} : memref<2x2x88x128xf32, #tpu.memory_space<vmem>>, vector<1x1x82x3xf32>,
    %c0_35 = arith.constant 0 : index
    %c0_36 = arith.constant 0 : index
    %c1_37 = arith.constant 1 : index
    %c3 = arith.constant 3 : index
    %72 = vector.load %arg2[%c0_35, %c0_36, %c1_37, %c3] : memref<2x2x88x128xf32, #tpu.memory_space<vmem>>, vector<1x1x82x2xf32>
    %73 = vector.shape_cast %72 : vector<1x1x82x2xf32> to vector<82x2xf32>
    %74 = vector.shape_cast %65 : vector<82x2xf32> to vector<1x1x82x2xf32>
    tpu.vector_store %arg2[%c0_35, %c0_36, %c1_37, %c3], %74 {strides = array<i32>} : memref<2x2x88x128xf32, #tpu.memory_space<vmem>>, vector<1x1x82x2xf32>,
    %75 = vector.extract_strided_slice %36 {offsets = [1, 0], sizes = [1, 29], strides = [1, 1]} : vector<2x29xf32> to vector<1x29xf32>
    %76 = vector.shape_cast %75 : vector<1x29xf32> to vector<1x29xf32>
    %77 = vector.broadcast %76 : vector<1x29xf32> to vector<8x29xf32>
    %78 = tpu.concatenate %77, %37 in 1 : vector<8x29xf32>, vector<8x3xf32> -> vector<8x32xf32>
    %79 = vector.broadcast %7 : vector<8x1xf32> to vector<8x32xf32>
    %80 = arith.mulf %79, %78 : vector<8x32xf32>
    %cst_38 = arith.constant dense<0.000000e+00> : vector<32xf32>
    %81 = vector.multi_reduction <add>, %80, %cst_38 [0] : vector<8x32xf32> to vector<32xf32>
    %82 = vector.shape_cast %81 : vector<32xf32> to vector<1x32xf32>
    %83 = tpu.concatenate %82, %78 in 0 : vector<1x32xf32>, vector<8x32xf32> -> vector<9x32xf32>
    %cst_39 = arith.constant dense<0.000000e+00> : vector<9x6xf32>
    %84 = tpu.matmul %83, %5, %cst_39 {dimension_numbers = #tpu.dot_dimension_numbers<[1], [0], [0], [1], [0, 0, 1, 1], [], []>} : vector<9x32xf32>, vector<32x6xf32>, vector<9x6xf32> -> vector<9x6xf32>
    %85 = vector.broadcast %6 : vector<1x6xf32> to vector<9x6xf32>
    %86 = arith.addf %84, %85 : vector<9x6xf32>
    %87 = vector.extract_strided_slice %86 {offsets = [0, 0], sizes = [1, 3], strides = [1, 1]} : vector<9x6xf32> to vector<1x3xf32>
    %88 = vector.extract_strided_slice %86 {offsets = [1, 3], sizes = [8, 3], strides = [1, 1]} : vector<9x6xf32> to vector<8x3xf32>
    %cst_40 = arith.constant dense<0.000000e+00> : vector<82x3xf32>
    %89 = tpu.matmul %8, %88, %cst_40 {dimension_numbers = #tpu.dot_dimension_numbers<[1], [0], [0], [1], [0, 0, 1, 1], [], []>} : vector<82x8xf32>, vector<8x3xf32>, vector<82x3xf32> -> vector<82x3xf32>
    %90 = vector.extract_strided_slice %87 {offsets = [0, 0], sizes = [1, 1], strides = [1, 1]} : vector<1x3xf32> to vector<1x1xf32>
    %cst_41 = arith.constant 2.560000e+02 : f32
    %91 = vector.broadcast %cst_41 : f32 to vector<1x1xf32>
    %92 = arith.mulf %90, %91 : vector<1x1xf32>
    %93 = vector.extract_strided_slice %87 {offsets = [0, 1], sizes = [1, 2], strides = [1, 1]} : vector<1x3xf32> to vector<1x2xf32>
    %cst_42 = arith.constant 1.280000e+02 : f32
    %94 = vector.broadcast %cst_42 : f32 to vector<1x2xf32>
    %95 = arith.mulf %93, %94 : vector<1x2xf32>
    %cst_43 = arith.constant 1.280000e+02 : f32
    %96 = vector.broadcast %cst_43 : f32 to vector<1x2xf32>
    %97 = arith.addf %95, %96 : vector<1x2xf32>
    %98 = vector.extract_strided_slice %89 {offsets = [0, 0], sizes = [82, 2], strides = [1, 1]} : vector<82x3xf32> to vector<82x2xf32>
    %99 = vector.broadcast %92 : vector<1x1xf32> to vector<82x2xf32>
    %100 = arith.mulf %99, %98 : vector<82x2xf32>
    %101 = vector.broadcast %97 : vector<1x2xf32> to vector<82x2xf32>
    %102 = arith.addf %100, %101 : vector<82x2xf32>
    %c0_44 = arith.constant 0 : index
    %c1_45 = arith.constant 1 : index
    %c0_46 = arith.constant 0 : index
    %c0_47 = arith.constant 0 : index
    %103 = vector.load %arg2[%c0_44, %c1_45, %c0_46, %c0_47] : memref<2x2x88x128xf32, #tpu.memory_space<vmem>>, vector<1x1x1x3xf32>
    %104 = vector.shape_cast %103 : vector<1x1x1x3xf32> to vector<1x3xf32>
    %105 = vector.shape_cast %87 : vector<1x3xf32> to vector<1x1x1x3xf32>
    tpu.vector_store %arg2[%c0_44, %c1_45, %c0_46, %c0_47], %105 {strides = array<i32>} : memref<2x2x88x128xf32, #tpu.memory_space<vmem>>, vector<1x1x1x3xf32>,
    %c0_48 = arith.constant 0 : index
    %c1_49 = arith.constant 1 : index
    %c1_50 = arith.constant 1 : index
    %c0_51 = arith.constant 0 : index
    %106 = vector.load %arg2[%c0_48, %c1_49, %c1_50, %c0_51] : memref<2x2x88x128xf32, #tpu.memory_space<vmem>>, vector<1x1x82x3xf32>
    %107 = vector.shape_cast %106 : vector<1x1x82x3xf32> to vector<82x3xf32>
    %108 = vector.shape_cast %89 : vector<82x3xf32> to vector<1x1x82x3xf32>
    tpu.vector_store %arg2[%c0_48, %c1_49, %c1_50, %c0_51], %108 {strides = array<i32>} : memref<2x2x88x128xf32, #tpu.memory_space<vmem>>, vector<1x1x82x3xf32>,
    %c0_52 = arith.constant 0 : index
    %c1_53 = arith.constant 1 : index
    %c1_54 = arith.constant 1 : index
    %c3_55 = arith.constant 3 : index
    %109 = vector.load %arg2[%c0_52, %c1_53, %c1_54, %c3_55] : memref<2x2x88x128xf32, #tpu.memory_space<vmem>>, vector<1x1x82x2xf32>
    %110 = vector.shape_cast %109 : vector<1x1x82x2xf32> to vector<82x2xf32>
    %111 = vector.shape_cast %102 : vector<82x2xf32> to vector<1x1x82x2xf32>
    tpu.vector_store %arg2[%c0_52, %c1_53, %c1_54, %c3_55], %111 {strides = array<i32>} : memref<2x2x88x128xf32, #tpu.memory_space<vmem>>, vector<1x1x82x2xf32>,
    %112 = vector.extract_strided_slice %4 {offsets = [0, 32], sizes = [2, 29], strides = [1, 1]} : vector<2x64xf32> to vector<2x29xf32>
    %c32_56 = arith.constant 32 : index
    %c32_57 = arith.constant 32 : index
    %113 = vector.load %arg0[%c32_56, %c32_57] : memref<128x128xf32, #tpu.memory_space<vmem>>, vector<1x29xf32>
    %114 = vector.broadcast %113 : vector<1x29xf32> to vector<2x29xf32>
    %115 = arith.addf %112, %114 : vector<2x29xf32>
    %cst_58 = arith.constant dense<0.000000e+00> : vector<2xf32>
    %116 = vector.multi_reduction <add>, %115, %cst_58 [1] : vector<2x29xf32> to vector<2xf32>
    %117 = vector.shape_cast %116 : vector<2xf32> to vector<2x1xf32>
    %cst_59 = arith.constant 2.900000e+01 : f32
    %118 = vector.broadcast %cst_59 : f32 to vector<2x1xf32>
    %119 = arith.divf %117, %118 : vector<2x1xf32>
    %120 = vector.broadcast %119 : vector<2x1xf32> to vector<2x29xf32>
    %121 = arith.subf %115, %120 : vector<2x29xf32>
    %122 = arith.mulf %121, %121 : vector<2x29xf32>
    %cst_60 = arith.constant dense<0.000000e+00> : vector<2xf32>
    %123 = vector.multi_reduction <add>, %122, %cst_60 [1] : vector<2x29xf32> to vector<2xf32>
    %124 = vector.shape_cast %123 : vector<2xf32> to vector<2x1xf32>
    %cst_61 = arith.constant 2.900000e+01 : f32
    %125 = vector.broadcast %cst_61 : f32 to vector<2x1xf32>
    %126 = arith.divf %124, %125 : vector<2x1xf32>
    %127 = vector.broadcast %119 : vector<2x1xf32> to vector<2x29xf32>
    %128 = arith.subf %115, %127 : vector<2x29xf32>
    %cst_62 = arith.constant 9.99999997E-7 : f32
    %129 = vector.broadcast %cst_62 : f32 to vector<2x1xf32>
    %130 = arith.addf %126, %129 : vector<2x1xf32>
    %131 = math.rsqrt %130 : vector<2x1xf32>
    %132 = vector.broadcast %131 : vector<2x1xf32> to vector<2x29xf32>
    %133 = arith.mulf %128, %132 : vector<2x29xf32>
    %c33_63 = arith.constant 33 : index
    %c32_64 = arith.constant 32 : index
    %134 = vector.load %arg0[%c33_63, %c32_64] : memref<128x128xf32, #tpu.memory_space<vmem>>, vector<1x29xf32>
    %135 = vector.broadcast %134 : vector<1x29xf32> to vector<2x29xf32>
    %136 = arith.mulf %133, %135 : vector<2x29xf32>
    %c34_65 = arith.constant 34 : index
    %c32_66 = arith.constant 32 : index
    %137 = vector.load %arg0[%c34_65, %c32_66] : memref<128x128xf32, #tpu.memory_space<vmem>>, vector<1x29xf32>
    %138 = vector.broadcast %137 : vector<1x29xf32> to vector<2x29xf32>
    %139 = arith.addf %136, %138 : vector<2x29xf32>
    %c32_67 = arith.constant 32 : index
    %c80 = arith.constant 80 : index
    %140 = vector.load %arg0[%c32_67, %c80] : memref<128x128xf32, #tpu.memory_space<vmem>>, vector<8x3xf32>
    %141 = vector.extract_strided_slice %139 {offsets = [0, 0], sizes = [1, 29], strides = [1, 1]} : vector<2x29xf32> to vector<1x29xf32>
    %142 = vector.shape_cast %141 : vector<1x29xf32> to vector<1x29xf32>
    %143 = vector.broadcast %142 : vector<1x29xf32> to vector<8x29xf32>
    %144 = tpu.concatenate %143, %140 in 1 : vector<8x29xf32>, vector<8x3xf32> -> vector<8x32xf32>
    %145 = vector.broadcast %7 : vector<8x1xf32> to vector<8x32xf32>
    %146 = arith.mulf %145, %144 : vector<8x32xf32>
    %cst_68 = arith.constant dense<0.000000e+00> : vector<32xf32>
    %147 = vector.multi_reduction <add>, %146, %cst_68 [0] : vector<8x32xf32> to vector<32xf32>
    %148 = vector.shape_cast %147 : vector<32xf32> to vector<1x32xf32>
    %149 = tpu.concatenate %148, %144 in 0 : vector<1x32xf32>, vector<8x32xf32> -> vector<9x32xf32>
    %cst_69 = arith.constant dense<0.000000e+00> : vector<9x6xf32>
    %150 = tpu.matmul %149, %5, %cst_69 {dimension_numbers = #tpu.dot_dimension_numbers<[1], [0], [0], [1], [0, 0, 1, 1], [], []>} : vector<9x32xf32>, vector<32x6xf32>, vector<9x6xf32> -> vector<9x6xf32>
    %151 = vector.broadcast %6 : vector<1x6xf32> to vector<9x6xf32>
    %152 = arith.addf %150, %151 : vector<9x6xf32>
    %153 = vector.extract_strided_slice %152 {offsets = [0, 0], sizes = [1, 3], strides = [1, 1]} : vector<9x6xf32> to vector<1x3xf32>
    %154 = vector.extract_strided_slice %152 {offsets = [1, 3], sizes = [8, 3], strides = [1, 1]} : vector<9x6xf32> to vector<8x3xf32>
    %cst_70 = arith.constant dense<0.000000e+00> : vector<82x3xf32>
    %155 = tpu.matmul %8, %154, %cst_70 {dimension_numbers = #tpu.dot_dimension_numbers<[1], [0], [0], [1], [0, 0, 1, 1], [], []>} : vector<82x8xf32>, vector<8x3xf32>, vector<82x3xf32> -> vector<82x3xf32>
    %156 = vector.extract_strided_slice %153 {offsets = [0, 0], sizes = [1, 1], strides = [1, 1]} : vector<1x3xf32> to vector<1x1xf32>
    %cst_71 = arith.constant 2.560000e+02 : f32
    %157 = vector.broadcast %cst_71 : f32 to vector<1x1xf32>
    %158 = arith.mulf %156, %157 : vector<1x1xf32>
    %159 = vector.extract_strided_slice %153 {offsets = [0, 1], sizes = [1, 2], strides = [1, 1]} : vector<1x3xf32> to vector<1x2xf32>
    %cst_72 = arith.constant 1.280000e+02 : f32
    %160 = vector.broadcast %cst_72 : f32 to vector<1x2xf32>
    %161 = arith.mulf %159, %160 : vector<1x2xf32>
    %cst_73 = arith.constant 1.280000e+02 : f32
    %162 = vector.broadcast %cst_73 : f32 to vector<1x2xf32>
    %163 = arith.addf %161, %162 : vector<1x2xf32>
    %164 = vector.extract_strided_slice %155 {offsets = [0, 0], sizes = [82, 2], strides = [1, 1]} : vector<82x3xf32> to vector<82x2xf32>
    %165 = vector.broadcast %158 : vector<1x1xf32> to vector<82x2xf32>
    %166 = arith.mulf %165, %164 : vector<82x2xf32>
    %167 = vector.broadcast %163 : vector<1x2xf32> to vector<82x2xf32>
    %168 = arith.addf %166, %167 : vector<82x2xf32>
    %c1_74 = arith.constant 1 : index
    %c0_75 = arith.constant 0 : index
    %c0_76 = arith.constant 0 : index
    %c0_77 = arith.constant 0 : index
    %169 = vector.load %arg2[%c1_74, %c0_75, %c0_76, %c0_77] : memref<2x2x88x128xf32, #tpu.memory_space<vmem>>, vector<1x1x1x3xf32>
    %170 = vector.shape_cast %169 : vector<1x1x1x3xf32> to vector<1x3xf32>
    %171 = vector.shape_cast %153 : vector<1x3xf32> to vector<1x1x1x3xf32>
    tpu.vector_store %arg2[%c1_74, %c0_75, %c0_76, %c0_77], %171 {strides = array<i32>} : memref<2x2x88x128xf32, #tpu.memory_space<vmem>>, vector<1x1x1x3xf32>,
    %c1_78 = arith.constant 1 : index
    %c0_79 = arith.constant 0 : index
    %c1_80 = arith.constant 1 : index
    %c0_81 = arith.constant 0 : index
    %172 = vector.load %arg2[%c1_78, %c0_79, %c1_80, %c0_81] : memref<2x2x88x128xf32, #tpu.memory_space<vmem>>, vector<1x1x82x3xf32>
    %173 = vector.shape_cast %172 : vector<1x1x82x3xf32> to vector<82x3xf32>
    %174 = vector.shape_cast %155 : vector<82x3xf32> to vector<1x1x82x3xf32>
    tpu.vector_store %arg2[%c1_78, %c0_79, %c1_80, %c0_81], %174 {strides = array<i32>} : memref<2x2x88x128xf32, #tpu.memory_space<vmem>>, vector<1x1x82x3xf32>,
    %c1_82 = arith.constant 1 : index
    %c0_83 = arith.constant 0 : index
    %c1_84 = arith.constant 1 : index
    %c3_85 = arith.constant 3 : index
    %175 = vector.load %arg2[%c1_82, %c0_83, %c1_84, %c3_85] : memref<2x2x88x128xf32, #tpu.memory_space<vmem>>, vector<1x1x82x2xf32>
    %176 = vector.shape_cast %175 : vector<1x1x82x2xf32> to vector<82x2xf32>
    %177 = vector.shape_cast %168 : vector<82x2xf32> to vector<1x1x82x2xf32>
    tpu.vector_store %arg2[%c1_82, %c0_83, %c1_84, %c3_85], %177 {strides = array<i32>} : memref<2x2x88x128xf32, #tpu.memory_space<vmem>>, vector<1x1x82x2xf32>,
    %178 = vector.extract_strided_slice %139 {offsets = [1, 0], sizes = [1, 29], strides = [1, 1]} : vector<2x29xf32> to vector<1x29xf32>
    %179 = vector.shape_cast %178 : vector<1x29xf32> to vector<1x29xf32>
    %180 = vector.broadcast %179 : vector<1x29xf32> to vector<8x29xf32>
    %181 = tpu.concatenate %180, %140 in 1 : vector<8x29xf32>, vector<8x3xf32> -> vector<8x32xf32>
    %182 = vector.broadcast %7 : vector<8x1xf32> to vector<8x32xf32>
    %183 = arith.mulf %182, %181 : vector<8x32xf32>
    %cst_86 = arith.constant dense<0.000000e+00> : vector<32xf32>
    %184 = vector.multi_reduction <add>, %183, %cst_86 [0] : vector<8x32xf32> to vector<32xf32>
    %185 = vector.shape_cast %184 : vector<32xf32> to vector<1x32xf32>
    %186 = tpu.concatenate %185, %181 in 0 : vector<1x32xf32>, vector<8x32xf32> -> vector<9x32xf32>
    %cst_87 = arith.constant dense<0.000000e+00> : vector<9x6xf32>
    %187 = tpu.matmul %186, %5, %cst_87 {dimension_numbers = #tpu.dot_dimension_numbers<[1], [0], [0], [1], [0, 0, 1, 1], [], []>} : vector<9x32xf32>, vector<32x6xf32>, vector<9x6xf32> -> vector<9x6xf32>
    %188 = vector.broadcast %6 : vector<1x6xf32> to vector<9x6xf32>
    %189 = arith.addf %187, %188 : vector<9x6xf32>
    %190 = vector.extract_strided_slice %189 {offsets = [0, 0], sizes = [1, 3], strides = [1, 1]} : vector<9x6xf32> to vector<1x3xf32>
    %191 = vector.extract_strided_slice %189 {offsets = [1, 3], sizes = [8, 3], strides = [1, 1]} : vector<9x6xf32> to vector<8x3xf32>
    %cst_88 = arith.constant dense<0.000000e+00> : vector<82x3xf32>
    %192 = tpu.matmul %8, %191, %cst_88 {dimension_numbers = #tpu.dot_dimension_numbers<[1], [0], [0], [1], [0, 0, 1, 1], [], []>} : vector<82x8xf32>, vector<8x3xf32>, vector<82x3xf32> -> vector<82x3xf32>
    %193 = vector.extract_strided_slice %190 {offsets = [0, 0], sizes = [1, 1], strides = [1, 1]} : vector<1x3xf32> to vector<1x1xf32>
    %cst_89 = arith.constant 2.560000e+02 : f32
    %194 = vector.broadcast %cst_89 : f32 to vector<1x1xf32>
    %195 = arith.mulf %193, %194 : vector<1x1xf32>
    %196 = vector.extract_strided_slice %190 {offsets = [0, 1], sizes = [1, 2], strides = [1, 1]} : vector<1x3xf32> to vector<1x2xf32>
    %cst_90 = arith.constant 1.280000e+02 : f32
    %197 = vector.broadcast %cst_90 : f32 to vector<1x2xf32>
    %198 = arith.mulf %196, %197 : vector<1x2xf32>
    %cst_91 = arith.constant 1.280000e+02 : f32
    %199 = vector.broadcast %cst_91 : f32 to vector<1x2xf32>
    %200 = arith.addf %198, %199 : vector<1x2xf32>
    %201 = vector.extract_strided_slice %192 {offsets = [0, 0], sizes = [82, 2], strides = [1, 1]} : vector<82x3xf32> to vector<82x2xf32>
    %202 = vector.broadcast %195 : vector<1x1xf32> to vector<82x2xf32>
    %203 = arith.mulf %202, %201 : vector<82x2xf32>
    %204 = vector.broadcast %200 : vector<1x2xf32> to vector<82x2xf32>
    %205 = arith.addf %203, %204 : vector<82x2xf32>
    %c1_92 = arith.constant 1 : index
    %c1_93 = arith.constant 1 : index
    %c0_94 = arith.constant 0 : index
    %c0_95 = arith.constant 0 : index
    %206 = vector.load %arg2[%c1_92, %c1_93, %c0_94, %c0_95] : memref<2x2x88x128xf32, #tpu.memory_space<vmem>>, vector<1x1x1x3xf32>
    %207 = vector.shape_cast %206 : vector<1x1x1x3xf32> to vector<1x3xf32>
    %208 = vector.shape_cast %190 : vector<1x3xf32> to vector<1x1x1x3xf32>
    tpu.vector_store %arg2[%c1_92, %c1_93, %c0_94, %c0_95], %208 {strides = array<i32>} : memref<2x2x88x128xf32, #tpu.memory_space<vmem>>, vector<1x1x1x3xf32>,
    %c1_96 = arith.constant 1 : index
    %c1_97 = arith.constant 1 : index
    %c1_98 = arith.constant 1 : index
    %c0_99 = arith.constant 0 : index
    %209 = vector.load %arg2[%c1_96, %c1_97, %c1_98, %c0_99] : memref<2x2x88x128xf32, #tpu.memory_space<vmem>>, vector<1x1x82x3xf32>
    %210 = vector.shape_cast %209 : vector<1x1x82x3xf32> to vector<82x3xf32>
    %211 = vector.shape_cast %192 : vector<82x3xf32> to vector<1x1x82x3xf32>
    tpu.vector_store %arg2[%c1_96, %c1_97, %c1_98, %c0_99], %211 {strides = array<i32>} : memref<2x2x88x128xf32, #tpu.memory_space<vmem>>, vector<1x1x82x3xf32>,
    %c1_100 = arith.constant 1 : index
    %c1_101 = arith.constant 1 : index
    %c1_102 = arith.constant 1 : index
    %c3_103 = arith.constant 3 : index
    %212 = vector.load %arg2[%c1_100, %c1_101, %c1_102, %c3_103] : memref<2x2x88x128xf32, #tpu.memory_space<vmem>>, vector<1x1x82x2xf32>
    %213 = vector.shape_cast %212 : vector<1x1x82x2xf32> to vector<82x2xf32>
    %214 = vector.shape_cast %205 : vector<82x2xf32> to vector<1x1x82x2xf32>
    tpu.vector_store %arg2[%c1_100, %c1_101, %c1_102, %c3_103], %214 {strides = array<i32>} : memref<2x2x88x128xf32, #tpu.memory_space<vmem>>, vector<1x1x82x2xf32>,
    return
  }
}

</mosaic_0001>

<llo_original>
// kernel: tpu_custom_call.1
$region0: #{tpu_custom_call.1}
  #allocation0 [shape = 'u32[]', space=smem, size = 0x4, offset = 0x4, fixed_abs, tag = 'smem constant byte address 0x4 - core index']
  #allocation1 [shape = 'u32[144,128]{1,0:T(1,128)}', space=vmem, size = 0x12000, scoped, tag = 'internal scratch']
  %s0 = inlined_call_operand.hbm [shape: f32[128,128], index: 0, kind: input, shape index: {}]
  %s1 = inlined_call_operand.vmem [shape: f32[2,32], index: 1, kind: input, shape index: {}]
  %s2 = inlined_call_operand.hbm [shape: f32[2,2,88,128], index: 2, kind: output, shape index: {}]
  %s3 = sld [smem:[#allocation0]]
  $region22: #{tpu_custom_call.1} parent=0
    _
  %s5 = ssub.s32 1, %s3
  %s6 = scalar_select 0, %s5, %s3
  $region1: #{tpu_custom_call.1} parent=0
    #allocation2 [shape = 'u8[65536]{0}', space=vmem, size = 0x10000, scoped, tag = 'input window, operand 0, single buffered']
    #allocation3 [shape = 's32[1]{0}', space=sflag, size = 0x4, scoped, tag = 'scoped memory for tpu_custom_call.1']
    #allocation4 [shape = 's32[1]{0}', space=sflag, size = 0x4, scoped, tag = 'scoped memory for tpu_custom_call.1']
    #allocation5 [shape = 'u8[180224]{0}', space=vmem, size = 0x2c000, scoped, tag = 'output window, operand 0, single buffered']
    %7 = vsyncpa [#allocation3], 0
    %8 = vsyncpa [#allocation4], 0
    // Predicated region
    $region2: #{tpu_custom_call.1} parent=1 // pred_check
      _
    $region3: #{tpu_custom_call.1} parent=1 // pred_check_branch
      %10 = sbr.rel (0) target = $region5
    $region4: #{tpu_custom_call.1} parent=1 // pred_region
      %s12 = ssub.s32 2048, 2048
      %13 = vsyncadd [#allocation3], %s12
      %s14 = sshll.u32 [#allocation2], 4
      %s15 = int_to_ptr.vmem [resolvable:$true] %s14
      %20 = dma.hbm_to_vmem [thread:$0]  %s0, 2048, %s15, [#allocation3], 128, 128, 8
    $region5: #{tpu_custom_call.1} parent=1 // pred_fallthru
      _
    // Predicated region
    $region6: #{tpu_custom_call.1} parent=1 // pred_check
      _
    $region7: #{tpu_custom_call.1} parent=1 // pred_check_branch
      %22 = sbr.rel (0) target = $region9
    $region8: #{tpu_custom_call.1} parent=1 // pred_region
      _
    $region9: #{tpu_custom_call.1} parent=1 // pred_fallthru
      _
    // Predicated region
    $region10: #{tpu_custom_call.1} parent=1 // pred_check
      _
    $region11: #{tpu_custom_call.1} parent=1 // pred_check_branch
      %24 = sbr.rel (0) target = $region13
    $region12: #{tpu_custom_call.1} parent=1 // pred_region
      %25 = dma.done [#allocation3], 2048
    $region13: #{tpu_custom_call.1} parent=1 // pred_fallthru
      _
    %26 = vst [vmem:[#allocation5] sm:$0xff] 0.0
    %27 = vst [vmem:[#allocation5 + $0x8] sm:$0xff] 0.0
    %28 = vst [vmem:[#allocation5 + $0x10] sm:$0xff] 0.0
    %29 = vst [vmem:[#allocation5 + $0x18] sm:$0xff] 0.0
    %30 = vst [vmem:[#allocation5 + $0x20] sm:$0xff] 0.0
    %31 = vst [vmem:[#allocation5 + $0x28] sm:$0xff] 0.0
    %32 = vst [vmem:[#allocation5 + $0x30] sm:$0xff] 0.0
    %33 = vst [vmem:[#allocation5 + $0x38] sm:$0xff] 0.0
    %34 = vst [vmem:[#allocation5 + $0x40] sm:$0xff] 0.0
    %35 = vst [vmem:[#allocation5 + $0x48] sm:$0xff] 0.0
    %36 = vst [vmem:[#allocation5 + $0x50] sm:$0xff] 0.0
    %37 = vst [vmem:[#allocation5 + $0x58] sm:$0xff] 0.0
    %38 = vst [vmem:[#allocation5 + $0x60] sm:$0xff] 0.0
    %39 = vst [vmem:[#allocation5 + $0x68] sm:$0xff] 0.0
    %40 = vst [vmem:[#allocation5 + $0x70] sm:$0xff] 0.0
    %41 = vst [vmem:[#allocation5 + $0x78] sm:$0xff] 0.0
    %42 = vst [vmem:[#allocation5 + $0x80] sm:$0xff] 0.0
    %43 = vst [vmem:[#allocation5 + $0x88] sm:$0xff] 0.0
    %44 = vst [vmem:[#allocation5 + $0x90] sm:$0xff] 0.0
    %45 = vst [vmem:[#allocation5 + $0x98] sm:$0xff] 0.0
    %46 = vst [vmem:[#allocation5 + $0xa0] sm:$0xff] 0.0
    %47 = vst [vmem:[#allocation5 + $0xa8] sm:$0xff] 0.0
    %48 = vst [vmem:[#allocation5 + $0xb0] sm:$0xff] 0.0
    %49 = vst [vmem:[#allocation5 + $0xb8] sm:$0xff] 0.0
    %50 = vst [vmem:[#allocation5 + $0xc0] sm:$0xff] 0.0
    %51 = vst [vmem:[#allocation5 + $0xc8] sm:$0xff] 0.0
    %52 = vst [vmem:[#allocation5 + $0xd0] sm:$0xff] 0.0
    %53 = vst [vmem:[#allocation5 + $0xd8] sm:$0xff] 0.0
    %54 = vst [vmem:[#allocation5 + $0xe0] sm:$0xff] 0.0
    %55 = vst [vmem:[#allocation5 + $0xe8] sm:$0xff] 0.0
    %56 = vst [vmem:[#allocation5 + $0xf0] sm:$0xff] 0.0
    %57 = vst [vmem:[#allocation5 + $0xf8] sm:$0xff] 0.0
    %58 = vst [vmem:[#allocation5 + $0x100] sm:$0xff] 0.0
    %59 = vst [vmem:[#allocation5 + $0x108] sm:$0xff] 0.0
    %60 = vst [vmem:[#allocation5 + $0x110] sm:$0xff] 0.0
    %61 = vst [vmem:[#allocation5 + $0x118] sm:$0xff] 0.0
    %62 = vst [vmem:[#allocation5 + $0x120] sm:$0xff] 0.0
    %63 = vst [vmem:[#allocation5 + $0x128] sm:$0xff] 0.0
    %64 = vst [vmem:[#allocation5 + $0x130] sm:$0xff] 0.0
    %65 = vst [vmem:[#allocation5 + $0x138] sm:$0xff] 0.0
    %66 = vst [vmem:[#allocation5 + $0x140] sm:$0xff] 0.0
    %67 = vst [vmem:[#allocation5 + $0x148] sm:$0xff] 0.0
    %68 = vst [vmem:[#allocation5 + $0x150] sm:$0xff] 0.0
    %69 = vst [vmem:[#allocation5 + $0x158] sm:$0xff] 0.0
    %v70 = vld [vmem:[%s1] sm:$0x3]
    %v71 = vld [vmem:[#allocation2] sm:$0xff]
    %v72 = vld [vmem:[#allocation2 + $0x8] sm:$0xff]
    %v73 = vld [vmem:[#allocation2 + $0x10] sm:$0xff]
    %v74 = vld [vmem:[#allocation2 + $0x18] sm:$0xff]
    %vm75 = vcmask 261120
    %v77 = vsel %vm75, %v70, 0
    %79 = vmatprep.subr.mxu0 0.0
    %80 = vmatpush1.msra.mxu0 %v71
    %81 = vmatprep.subr.mxu0 0.0
    %82 = vmatpush1.msra.mxu0 %v72
    %83 = vmatprep.subr.mxu0 0.0
    %84 = vmatpush1.msra.mxu0 %v73
    %85 = vmatprep.subr.mxu0 0.0
    %86 = vmatpush1.msra.mxu0 %v74
    %87 = vmatprep.subr.mxu0 0.0
    %88 = vmatpush1.msra.mxu0 0.0
    %89 = vmatprep.subr.mxu0 0.0
    %90 = vmatpush1.msra.mxu0 0.0
    %91 = vmatprep.subr.mxu0 0.0
    %92 = vmatpush1.msra.mxu0 0.0
    %93 = vmatprep.subr.mxu0 0.0
    %94 = vmatpush1.msra.mxu0 0.0
    %95 = vmatprep.subr.mxu0 0.0
    %96 = vmatpush1.msra.mxu0 0.0
    %97 = vmatprep.subr.mxu0 0.0
    %98 = vmatpush1.msra.mxu0 0.0
    %99 = vmatprep.subr.mxu0 0.0
    %100 = vmatpush1.msra.mxu0 0.0
    %101 = vmatprep.subr.mxu0 0.0
    %102 = vmatpush1.msra.mxu0 0.0
    %103 = vmatprep.subr.mxu0 0.0
    %104 = vmatpush1.msra.mxu0 0.0
    %105 = vmatprep.subr.mxu0 0.0
    %106 = vmatpush1.msra.mxu0 0.0
    %107 = vmatprep.subr.mxu0 0.0
    %108 = vmatpush1.msra.mxu0 0.0
    %109 = vmatprep.subr.mxu0 0.0
    %110 = vmatpush1.msra.mxu0 0.0
    %111 = vmatprep.subr.mxu0 0.0
    %112 = vmatpush1.msra.mxu0 0.0
    %113 = vmatprep.subr.mxu0 0.0
    %114 = vmatpush1.msra.mxu0 0.0
    %115 = vmatprep.subr.mxu0 0.0
    %116 = vmatpush1.msra.mxu0 0.0
    %117 = vmatprep.subr.mxu0 0.0
    %118 = vmatpush1.msra.mxu0 0.0
    %119 = vmatprep.subr.mxu0 0.0
    %120 = vmatpush1.msra.mxu0 0.0
    %121 = vmatprep.subr.mxu0 0.0
    %122 = vmatpush1.msra.mxu0 0.0
    %123 = vmatprep.subr.mxu0 0.0
    %124 = vmatpush1.msra.mxu0 0.0
    %125 = vmatprep.subr.mxu0 0.0
    %126 = vmatpush1.msra.mxu0 0.0
    %127 = vmatprep.subr.mxu0 0.0
    %128 = vmatpush1.msra.mxu0 0.0
    %129 = vmatprep.subr.mxu0 0.0
    %130 = vmatpush1.msra.mxu0 0.0
    %131 = vmatprep.subr.mxu0 0.0
    %132 = vmatpush1.msra.mxu0 0.0
    %133 = vmatprep.subr.mxu0 0.0
    %134 = vmatpush1.msra.mxu0 0.0
    %135 = vmatprep.subr.mxu0 0.0
    %136 = vmatpush1.msra.mxu0 0.0
    %137 = vmatprep.subr.mxu0 0.0
    %138 = vmatpush1.msra.mxu0 0.0
    %139 = vmatprep.subr.mxu0 0.0
    %140 = vmatpush1.msra.mxu0 0.0
    %141 = vmatprep.subr.mxu0 0.0
    %142 = vmatpush1.msra.mxu0 0.0
    %143 = vmatprep.mubr.f32.mxu0 0.0
    %144 = vmatmul.mubr.f32.gmra.mrb[0].mxu0 %v77
    %v145 = vpop.f32.mrb[0].mxu0
    %v146 = vadd.f32 0.0, %v145
    %v147 = vpop.f32.mrb[0].mxu0
    %148 = vdwg.mxu0
    %v149 = vld [vmem:[#allocation2 + $0x23] sm:$0x1]
    %v150 = vld [vmem:[#allocation2 + $0x20] sm:$0xff]
    %v151 = vld [vmem:[#allocation2 + $0x28] sm:$0xff]
    %v152 = vld [vmem:[#allocation2 + $0x30] sm:$0xff]
    %v153 = vld [vmem:[#allocation2 + $0x38] sm:$0xff]
    %v154 = vld [vmem:[#allocation2 + $0x40] sm:$0xff]
    %v155 = vld [vmem:[#allocation2 + $0x48] sm:$0xff]
    %v156 = vld [vmem:[#allocation2 + $0x50] sm:$0xff]
    %v157 = vld [vmem:[#allocation2 + $0x58] sm:$0xff]
    %v158 = vld [vmem:[#allocation2 + $0x60] sm:$0xff]
    %v159 = vld [vmem:[#allocation2 + $0x68] sm:$0xff]
    %v160 = vld [vmem:[#allocation2 + $0x70] sm:$0xff]
    %v161 = vld [vmem:[#allocation2 + $0x78] sm:$0x3]
    %v162 = vld [vmem:[#allocation2 + $0x20] sm:$0x1]
    %v163 = vlaneseq
    %v164 = vshrl.u32 %v163, 7
    %v165 = vsub.s32 0, %v164
    %v166 = vrot.slane %v162, %v165
    %v167 = vadd.f32 %v146, %v166
    %vm168 = vcmask 230400
    %v169 = vsel %vm168, %v167, 0.0
    %170 = vadd.xlane.f32.xlu0 %v169
    %v171 = vpop.xlane.xlu0 %170
    %v172 = vrcp.pop 29.0
    %v173 = vmul.f32 %v171, %v172
    %v174 = vsub.f32 %v167, %v173
    %v175 = vmul.f32 %v174, %v174
    %v176 = vsel %vm168, %v175, 0.0
    %177 = vadd.xlane.f32.xlu0 %v176
    %v178 = vpop.xlane.xlu0 %177
    %v179 = vmul.f32 %v178, %v172
    %v180 = vadd.f32 %v179, 1e-06
    %v181 = vrsqrt.pop %v180
    %v182 = vmul.f32 %v174, %v181
    %v183 = vld [vmem:[#allocation2 + $0x21] sm:$0x1]
    %v184 = vlaneseq
    %v185 = vshrl.u32 %v184, 7
    %v186 = vsub.s32 0, %v185
    %v187 = vrot.slane %v183, %v186
    %v188 = vmul.f32 %v182, %v187
    %v189 = vld [vmem:[#allocation2 + $0x22] sm:$0x1]
    %v190 = vlaneseq
    %v191 = vshrl.u32 %v190, 7
    %v192 = vsub.s32 0, %v191
    %v193 = vrot.slane %v189, %v192
    %v194 = vadd.f32 %v188, %v193
    %v195 = vlaneseq
    %v196 = vshrl.u32 %v195, 7
    %v197 = vsub.s32 0, %v196
    %v198 = vrot.slane %v194, %v197
    %200 = vrot.lane.b32.xlu0 %v150, 85
    %v201 = vpop.permute.xlu0 %200
    %vm203 = vcmask 236544
    %v204 = vsel %vm203, %v198, %v201
    %205 = vset.pattern.permute.xlu0 64
    %206 = vperm.xlu0 %205, %v150
    %v207 = vpop.permute.xlu0 %206
    %v209 = vmul.f32 %v207, %v204
    %v210 = vsel %vm75, %v209, 0.0
    %v211 = vrot.slane %v210, 4
    %v212 = vadd.f32 %v210, %v211
    %v213 = vrot.slane %v212, 2
    %v214 = vadd.f32 %v212, %v213
    %v215 = vrot.slane %v214, 1
    %v216 = vadd.f32 %v214, %v215
    %v218 = vrot.slane %v204, 7
    %vm220 = vcmask 1040384
    %v221 = vsel %vm220, %v216, %v218
    %v222 = vlaneseq
    %v223 = vshrl.u32 %v222, 7
    %v224 = vsub.s32 0, %v223
    %v225 = vrot.slane %v149, %v224
    %230 = vrot.lane.b32.xlu0 %v71, 64
    %v231 = vpop.permute.xlu0 %230
    %232 = vrot.lane.b32.xlu0 %v72, 64
    %v233 = vpop.permute.xlu0 %232
    %234 = vrot.lane.b32.xlu0 %v73, 64
    %v235 = vpop.permute.xlu0 %234
    %236 = vrot.lane.b32.xlu0 %v74, 64
    %v237 = vpop.permute.xlu0 %236
    %v243 = vsel %vm75, %v221, 0
    %v245 = vsel %vm75, %v218, 0
    %247 = vmatprep.subr.mxu0 0.0
    %248 = vmatpush1.msra.mxu0 %v231
    %249 = vmatprep.subr.mxu0 0.0
    %250 = vmatpush1.msra.mxu0 %v233
    %251 = vmatprep.subr.mxu0 0.0
    %252 = vmatpush1.msra.mxu0 %v235
    %253 = vmatprep.subr.mxu0 0.0
    %254 = vmatpush1.msra.mxu0 %v237
    %255 = vmatprep.subr.mxu0 0.0
    %256 = vmatpush1.msra.mxu0 0.0
    %257 = vmatprep.subr.mxu0 0.0
    %258 = vmatpush1.msra.mxu0 0.0
    %259 = vmatprep.subr.mxu0 0.0
    %260 = vmatpush1.msra.mxu0 0.0
    %261 = vmatprep.subr.mxu0 0.0
    %262 = vmatpush1.msra.mxu0 0.0
    %263 = vmatprep.subr.mxu0 0.0
    %264 = vmatpush1.msra.mxu0 0.0
    %265 = vmatprep.subr.mxu0 0.0
    %266 = vmatpush1.msra.mxu0 0.0
    %267 = vmatprep.subr.mxu0 0.0
    %268 = vmatpush1.msra.mxu0 0.0
    %269 = vmatprep.subr.mxu0 0.0
    %270 = vmatpush1.msra.mxu0 0.0
    %271 = vmatprep.subr.mxu0 0.0
    %272 = vmatpush1.msra.mxu0 0.0
    %273 = vmatprep.subr.mxu0 0.0
    %274 = vmatpush1.msra.mxu0 0.0
    %275 = vmatprep.subr.mxu0 0.0
    %276 = vmatpush1.msra.mxu0 0.0
    %277 = vmatprep.subr.mxu0 0.0
    %278 = vmatpush1.msra.mxu0 0.0
    %279 = vmatprep.subr.mxu0 0.0
    %280 = vmatpush1.msra.mxu0 0.0
    %281 = vmatprep.subr.mxu0 0.0
    %282 = vmatpush1.msra.mxu0 0.0
    %283 = vmatprep.subr.mxu0 0.0
    %284 = vmatpush1.msra.mxu0 0.0
    %285 = vmatprep.subr.mxu0 0.0
    %286 = vmatpush1.msra.mxu0 0.0
    %287 = vmatprep.subr.mxu0 0.0
    %288 = vmatpush1.msra.mxu0 0.0
    %289 = vmatprep.subr.mxu0 0.0
    %290 = vmatpush1.msra.mxu0 0.0
    %291 = vmatprep.subr.mxu0 0.0
    %292 = vmatpush1.msra.mxu0 0.0
    %293 = vmatprep.subr.mxu0 0.0
    %294 = vmatpush1.msra.mxu0 0.0
    %295 = vmatprep.subr.mxu0 0.0
    %296 = vmatpush1.msra.mxu0 0.0
    %297 = vmatprep.subr.mxu0 0.0
    %298 = vmatpush1.msra.mxu0 0.0
    %299 = vmatprep.subr.mxu0 0.0
    %300 = vmatpush1.msra.mxu0 0.0
    %301 = vmatprep.subr.mxu0 0.0
    %302 = vmatpush1.msra.mxu0 0.0
    %303 = vmatprep.subr.mxu0 0.0
    %304 = vmatpush1.msra.mxu0 0.0
    %305 = vmatprep.subr.mxu0 0.0
    %306 = vmatpush1.msra.mxu0 0.0
    %307 = vmatprep.subr.mxu0 0.0
    %308 = vmatpush1.msra.mxu0 0.0
    %309 = vmatprep.subr.mxu0 0.0
    %310 = vmatpush1.msra.mxu0 0.0
    %311 = vmatprep.mubr.f32.mxu0 0.0
    %312 = vmatmul.mubr.f32.gmra.mrb[0].mxu0 %v243
    %v313 = vpop.f32.mrb[0].mxu0
    %v314 = vadd.f32 %v225, %v313
    %v315 = vpop.f32.mrb[0].mxu0
    %316 = vmatprep.mubr.f32.mxu0 0.0
    %317 = vmatmul.mubr.f32.gmra.mrb[0].mxu0 %v245
    %v318 = vpop.f32.mrb[0].mxu0
    %v319 = vadd.f32 %v225, %v318
    %v320 = vpop.f32.mrb[0].mxu0
    %321 = vdwg.mxu0
    %vm324 = vcmask 1046528
    %v325 = vrot.slane %v314, 1
    %v326 = vrot.slane %v319, 1
    %v327 = vsel %vm324, %v325, %v326
    %328 = vrot.lane.b32.xlu0 %v327, 125
    %v329 = vpop.permute.xlu0 %328
    %vm331 = vcmask 64512
    %v333 = vsel %vm331, %v151, 0
    %v336 = vsel %vm331, %v152, 0
    %v339 = vsel %vm331, %v153, 0
    %v342 = vsel %vm331, %v154, 0
    %v345 = vsel %vm331, %v155, 0
    %v348 = vsel %vm331, %v156, 0
    %v351 = vsel %vm331, %v157, 0
    %v354 = vsel %vm331, %v158, 0
    %v357 = vsel %vm331, %v159, 0
    %v360 = vsel %vm331, %v160, 0
    %v363 = vsel %vm331, %v161, 0
    %365 = vmatprep.subr.mxu0 0.0
    %366 = vmatpush1.msra.mxu0 %v329
    %367 = vmatprep.subr.mxu0 0.0
    %368 = vmatpush1.msra.mxu0 0.0
    %369 = vmatprep.subr.mxu0 0.0
    %370 = vmatpush1.msra.mxu0 0.0
    %371 = vmatprep.subr.mxu0 0.0
    %372 = vmatpush1.msra.mxu0 0.0
    %373 = vmatprep.subr.mxu0 0.0
    %374 = vmatpush1.msra.mxu0 0.0
    %375 = vmatprep.subr.mxu0 0.0
    %376 = vmatpush1.msra.mxu0 0.0
    %377 = vmatprep.subr.mxu0 0.0
    %378 = vmatpush1.msra.mxu0 0.0
    %379 = vmatprep.subr.mxu0 0.0
    %380 = vmatpush1.msra.mxu0 0.0
    %381 = vmatprep.subr.mxu0 0.0
    %382 = vmatpush1.msra.mxu0 0.0
    %383 = vmatprep.subr.mxu0 0.0
    %384 = vmatpush1.msra.mxu0 0.0
    %385 = vmatprep.subr.mxu0 0.0
    %386 = vmatpush1.msra.mxu0 0.0
    %387 = vmatprep.subr.mxu0 0.0
    %388 = vmatpush1.msra.mxu0 0.0
    %389 = vmatprep.subr.mxu0 0.0
    %390 = vmatpush1.msra.mxu0 0.0
    %391 = vmatprep.subr.mxu0 0.0
    %392 = vmatpush1.msra.mxu0 0.0
    %393 = vmatprep.subr.mxu0 0.0
    %394 = vmatpush1.msra.mxu0 0.0
    %395 = vmatprep.subr.mxu0 0.0
    %396 = vmatpush1.msra.mxu0 0.0
    %397 = vmatprep.subr.mxu0 0.0
    %398 = vmatpush1.msra.mxu0 0.0
    %399 = vmatprep.subr.mxu0 0.0
    %400 = vmatpush1.msra.mxu0 0.0
    %401 = vmatprep.subr.mxu0 0.0
    %402 = vmatpush1.msra.mxu0 0.0
    %403 = vmatprep.subr.mxu0 0.0
    %404 = vmatpush1.msra.mxu0 0.0
    %405 = vmatprep.subr.mxu0 0.0
    %406 = vmatpush1.msra.mxu0 0.0
    %407 = vmatprep.subr.mxu0 0.0
    %408 = vmatpush1.msra.mxu0 0.0
    %409 = vmatprep.subr.mxu0 0.0
    %410 = vmatpush1.msra.mxu0 0.0
    %411 = vmatprep.subr.mxu0 0.0
    %412 = vmatpush1.msra.mxu0 0.0
    %413 = vmatprep.subr.mxu0 0.0
    %414 = vmatpush1.msra.mxu0 0.0
    %415 = vmatprep.subr.mxu0 0.0
    %416 = vmatpush1.msra.mxu0 0.0
    %417 = vmatprep.subr.mxu0 0.0
    %418 = vmatpush1.msra.mxu0 0.0
    %419 = vmatprep.subr.mxu0 0.0
    %420 = vmatpush1.msra.mxu0 0.0
    %421 = vmatprep.subr.mxu0 0.0
    %422 = vmatpush1.msra.mxu0 0.0
    %423 = vmatprep.subr.mxu0 0.0
    %424 = vmatpush1.msra.mxu0 0.0
    %425 = vmatprep.subr.mxu0 0.0
    %426 = vmatpush1.msra.mxu0 0.0
    %427 = vmatprep.subr.mxu0 0.0
    %428 = vmatpush1.msra.mxu0 0.0
    %429 = vmatprep.mubr.f32.mxu0 0.0
    %430 = vmatmul.mubr.f32.gmra.mrb[0].mxu0 %v333
    %v431 = vpop.f32.mrb[0].mxu0
    %v432 = vadd.f32 0.0, %v431
    %v433 = vpop.f32.mrb[0].mxu0
    %434 = vmatprep.mubr.f32.mxu0 0.0
    %435 = vmatmul.mubr.f32.gmra.mrb[0].mxu0 %v336
    %v436 = vpop.f32.mrb[0].mxu0
    %v437 = vadd.f32 0.0, %v436
    %v438 = vpop.f32.mrb[0].mxu0
    %439 = vmatprep.mubr.f32.mxu0 0.0
    %440 = vmatmul.mubr.f32.gmra.mrb[0].mxu0 %v339
    %v441 = vpop.f32.mrb[0].mxu0
    %v442 = vadd.f32 0.0, %v441
    %v443 = vpop.f32.mrb[0].mxu0
    %444 = vmatprep.mubr.f32.mxu0 0.0
    %445 = vmatmul.mubr.f32.gmra.mrb[0].mxu0 %v342
    %v446 = vpop.f32.mrb[0].mxu0
    %v447 = vadd.f32 0.0, %v446
    %v448 = vpop.f32.mrb[0].mxu0
    %449 = vmatprep.mubr.f32.mxu0 0.0
    %450 = vmatmul.mubr.f32.gmra.mrb[0].mxu0 %v345
    %v451 = vpop.f32.mrb[0].mxu0
    %v452 = vadd.f32 0.0, %v451
    %v453 = vpop.f32.mrb[0].mxu0
    %454 = vmatprep.mubr.f32.mxu0 0.0
    %455 = vmatmul.mubr.f32.gmra.mrb[0].mxu0 %v348
    %v456 = vpop.f32.mrb[0].mxu0
    %v457 = vadd.f32 0.0, %v456
    %v458 = vpop.f32.mrb[0].mxu0
    %459 = vmatprep.mubr.f32.mxu0 0.0
    %460 = vmatmul.mubr.f32.gmra.mrb[0].mxu0 %v351
    %v461 = vpop.f32.mrb[0].mxu0
    %v462 = vadd.f32 0.0, %v461
    %v463 = vpop.f32.mrb[0].mxu0
    %464 = vmatprep.mubr.f32.mxu0 0.0
    %465 = vmatmul.mubr.f32.gmra.mrb[0].mxu0 %v354
    %v466 = vpop.f32.mrb[0].mxu0
    %v467 = vadd.f32 0.0, %v466
    %v468 = vpop.f32.mrb[0].mxu0
    %469 = vmatprep.mubr.f32.mxu0 0.0
    %470 = vmatmul.mubr.f32.gmra.mrb[0].mxu0 %v357
    %v471 = vpop.f32.mrb[0].mxu0
    %v472 = vadd.f32 0.0, %v471
    %v473 = vpop.f32.mrb[0].mxu0
    %474 = vmatprep.mubr.f32.mxu0 0.0
    %475 = vmatmul.mubr.f32.gmra.mrb[0].mxu0 %v360
    %v476 = vpop.f32.mrb[0].mxu0
    %v477 = vadd.f32 0.0, %v476
    %v478 = vpop.f32.mrb[0].mxu0
    %479 = vmatprep.mubr.f32.mxu0 0.0
    %480 = vmatmul.mubr.f32.gmra.mrb[0].mxu0 %v363
    %v481 = vpop.f32.mrb[0].mxu0
    %v482 = vadd.f32 0.0, %v481
    %v483 = vpop.f32.mrb[0].mxu0
    %484 = vdwg.mxu0
    %v485 = vmul.f32 %v314, 256.0
    %v486 = vmul.f32 %v314, 128.0
    %v487 = vadd.f32 %v486, 128.0
    %s489 = vtos %v485
    %v490 = vstv %s489
    %v492 = vmul.f32 %v490, %v432
    %v493 = vmul.f32 %v490, %v437
    %v494 = vmul.f32 %v490, %v442
    %v495 = vmul.f32 %v490, %v447
    %v496 = vmul.f32 %v490, %v452
    %v497 = vmul.f32 %v490, %v457
    %v498 = vmul.f32 %v490, %v462
    %v499 = vmul.f32 %v490, %v467
    %v500 = vmul.f32 %v490, %v472
    %v501 = vmul.f32 %v490, %v477
    %v502 = vmul.f32 %v490, %v482
    %v503 = vlaneseq
    %v504 = vshrl.u32 %v503, 7
    %v505 = vsub.s32 0, %v504
    %v506 = vrot.slane %v487, %v505
    %508 = vrot.lane.b32.xlu0 %v506, 127
    %v509 = vpop.permute.xlu0 %508
    %v511 = vadd.f32 %v492, %v509
    %v512 = vadd.f32 %v493, %v509
    %v513 = vadd.f32 %v494, %v509
    %v514 = vadd.f32 %v495, %v509
    %v515 = vadd.f32 %v496, %v509
    %v516 = vadd.f32 %v497, %v509
    %v517 = vadd.f32 %v498, %v509
    %v518 = vadd.f32 %v499, %v509
    %v519 = vadd.f32 %v500, %v509
    %v520 = vadd.f32 %v501, %v509
    %v521 = vadd.f32 %v502, %v509
    %vm522 = vcmask 16384
    %523 = vst.msk [vmem:[#allocation5] sm:$0x1] %vm522, %v314
    %vm524 = vcmask 23552
    %525 = vst.msk [vmem:[#allocation5 + $0x1] sm:$0xff] %vm524, %v432
    %526 = vst.msk [vmem:[#allocation5 + $0x9] sm:$0xff] %vm524, %v437
    %527 = vst.msk [vmem:[#allocation5 + $0x11] sm:$0xff] %vm524, %v442
    %528 = vst.msk [vmem:[#allocation5 + $0x19] sm:$0xff] %vm524, %v447
    %529 = vst.msk [vmem:[#allocation5 + $0x21] sm:$0xff] %vm524, %v452
    %530 = vst.msk [vmem:[#allocation5 + $0x29] sm:$0xff] %vm524, %v457
    %531 = vst.msk [vmem:[#allocation5 + $0x31] sm:$0xff] %vm524, %v462
    %532 = vst.msk [vmem:[#allocation5 + $0x39] sm:$0xff] %vm524, %v467
    %533 = vst.msk [vmem:[#allocation5 + $0x41] sm:$0xff] %vm524, %v472
    %534 = vst.msk [vmem:[#allocation5 + $0x49] sm:$0xff] %vm524, %v477
    %vm535 = vcmask 17408
    %536 = vst.msk [vmem:[#allocation5 + $0x51] sm:$0x3] %vm535, %v482
    %548 = vrot.lane.b32.xlu0 %v511, 3
    %v549 = vpop.permute.xlu0 %548
    %550 = vrot.lane.b32.xlu0 %v512, 3
    %v551 = vpop.permute.xlu0 %550
    %552 = vrot.lane.b32.xlu0 %v513, 3
    %v553 = vpop.permute.xlu0 %552
    %554 = vrot.lane.b32.xlu0 %v514, 3
    %v555 = vpop.permute.xlu0 %554
    %556 = vrot.lane.b32.xlu0 %v515, 3
    %v557 = vpop.permute.xlu0 %556
    %558 = vrot.lane.b32.xlu0 %v516, 3
    %v559 = vpop.permute.xlu0 %558
    %560 = vrot.lane.b32.xlu0 %v517, 3
    %v561 = vpop.permute.xlu0 %560
    %562 = vrot.lane.b32.xlu0 %v518, 3
    %v563 = vpop.permute.xlu0 %562
    %564 = vrot.lane.b32.xlu0 %v519, 3
    %v565 = vpop.permute.xlu0 %564
    %566 = vrot.lane.b32.xlu0 %v520, 3
    %v567 = vpop.permute.xlu0 %566
    %568 = vrot.lane.b32.xlu0 %v521, 3
    %v569 = vpop.permute.xlu0 %568
    %vm581 = vcmask 39960
    %582 = vst.msk [vmem:[#allocation5 + $0x1] sm:$0xff] %vm581, %v549
    %583 = vst.msk [vmem:[#allocation5 + $0x9] sm:$0xff] %vm581, %v551
    %584 = vst.msk [vmem:[#allocation5 + $0x11] sm:$0xff] %vm581, %v553
    %585 = vst.msk [vmem:[#allocation5 + $0x19] sm:$0xff] %vm581, %v555
    %586 = vst.msk [vmem:[#allocation5 + $0x21] sm:$0xff] %vm581, %v557
    %587 = vst.msk [vmem:[#allocation5 + $0x29] sm:$0xff] %vm581, %v559
    %588 = vst.msk [vmem:[#allocation5 + $0x31] sm:$0xff] %vm581, %v561
    %589 = vst.msk [vmem:[#allocation5 + $0x39] sm:$0xff] %vm581, %v563
    %590 = vst.msk [vmem:[#allocation5 + $0x41] sm:$0xff] %vm581, %v565
    %591 = vst.msk [vmem:[#allocation5 + $0x49] sm:$0xff] %vm581, %v567
    %vm592 = vcmask 33816
    %593 = vst.msk [vmem:[#allocation5 + $0x51] sm:$0x3] %vm592, %v569
    %v594 = vlaneseq
    %v595 = vshrl.u32 %v594, 7
    %v596 = vsub.s32 1, %v595
    %v597 = vrot.slane %v194, %v596
    %v598 = vsel %vm203, %v597, %v201
    %v599 = vmul.f32 %v207, %v598
    %v600 = vsel %vm75, %v599, 0.0
    %v601 = vrot.slane %v600, 4
    %v602 = vadd.f32 %v600, %v601
    %v603 = vrot.slane %v602, 2
    %v604 = vadd.f32 %v602, %v603
    %v605 = vrot.slane %v604, 1
    %v606 = vadd.f32 %v604, %v605
    %v608 = vrot.slane %v598, 7
    %v610 = vsel %vm220, %v606, %v608
    %v612 = vsel %vm75, %v610, 0
    %v614 = vsel %vm75, %v608, 0
    %616 = vmatprep.subr.mxu0 0.0
    %617 = vmatpush1.msra.mxu0 %v231
    %618 = vmatprep.subr.mxu0 0.0
    %619 = vmatpush1.msra.mxu0 %v233
    %620 = vmatprep.subr.mxu0 0.0
    %621 = vmatpush1.msra.mxu0 %v235
    %622 = vmatprep.subr.mxu0 0.0
    %623 = vmatpush1.msra.mxu0 %v237
    %624 = vmatprep.subr.mxu0 0.0
    %625 = vmatpush1.msra.mxu0 0.0
    %626 = vmatprep.subr.mxu0 0.0
    %627 = vmatpush1.msra.mxu0 0.0
    %628 = vmatprep.subr.mxu0 0.0
    %629 = vmatpush1.msra.mxu0 0.0
    %630 = vmatprep.subr.mxu0 0.0
    %631 = vmatpush1.msra.mxu0 0.0
    %632 = vmatprep.subr.mxu0 0.0
    %633 = vmatpush1.msra.mxu0 0.0
    %634 = vmatprep.subr.mxu0 0.0
    %635 = vmatpush1.msra.mxu0 0.0
    %636 = vmatprep.subr.mxu0 0.0
    %637 = vmatpush1.msra.mxu0 0.0
    %638 = vmatprep.subr.mxu0 0.0
    %639 = vmatpush1.msra.mxu0 0.0
    %640 = vmatprep.subr.mxu0 0.0
    %641 = vmatpush1.msra.mxu0 0.0
    %642 = vmatprep.subr.mxu0 0.0
    %643 = vmatpush1.msra.mxu0 0.0
    %644 = vmatprep.subr.mxu0 0.0
    %645 = vmatpush1.msra.mxu0 0.0
    %646 = vmatprep.subr.mxu0 0.0
    %647 = vmatpush1.msra.mxu0 0.0
    %648 = vmatprep.subr.mxu0 0.0
    %649 = vmatpush1.msra.mxu0 0.0
    %650 = vmatprep.subr.mxu0 0.0
    %651 = vmatpush1.msra.mxu0 0.0
    %652 = vmatprep.subr.mxu0 0.0
    %653 = vmatpush1.msra.mxu0 0.0
    %654 = vmatprep.subr.mxu0 0.0
    %655 = vmatpush1.msra.mxu0 0.0
    %656 = vmatprep.subr.mxu0 0.0
    %657 = vmatpush1.msra.mxu0 0.0
    %658 = vmatprep.subr.mxu0 0.0
    %659 = vmatpush1.msra.mxu0 0.0
    %660 = vmatprep.subr.mxu0 0.0
    %661 = vmatpush1.msra.mxu0 0.0
    %662 = vmatprep.subr.mxu0 0.0
    %663 = vmatpush1.msra.mxu0 0.0
    %664 = vmatprep.subr.mxu0 0.0
    %665 = vmatpush1.msra.mxu0 0.0
    %666 = vmatprep.subr.mxu0 0.0
    %667 = vmatpush1.msra.mxu0 0.0
    %668 = vmatprep.subr.mxu0 0.0
    %669 = vmatpush1.msra.mxu0 0.0
    %670 = vmatprep.subr.mxu0 0.0
    %671 = vmatpush1.msra.mxu0 0.0
    %672 = vmatprep.subr.mxu0 0.0
    %673 = vmatpush1.msra.mxu0 0.0
    %674 = vmatprep.subr.mxu0 0.0
    %675 = vmatpush1.msra.mxu0 0.0
    %676 = vmatprep.subr.mxu0 0.0
    %677 = vmatpush1.msra.mxu0 0.0
    %678 = vmatprep.subr.mxu0 0.0
    %679 = vmatpush1.msra.mxu0 0.0
    %680 = vmatprep.mubr.f32.mxu0 0.0
    %681 = vmatmul.mubr.f32.gmra.mrb[0].mxu0 %v612
    %v682 = vpop.f32.mrb[0].mxu0
    %v683 = vadd.f32 %v225, %v682
    %v684 = vpop.f32.mrb[0].mxu0
    %685 = vmatprep.mubr.f32.mxu0 0.0
    %686 = vmatmul.mubr.f32.gmra.mrb[0].mxu0 %v614
    %v687 = vpop.f32.mrb[0].mxu0
    %v688 = vadd.f32 %v225, %v687
    %v689 = vpop.f32.mrb[0].mxu0
    %690 = vdwg.mxu0
    %v693 = vrot.slane %v683, 1
    %v694 = vrot.slane %v688, 1
    %v695 = vsel %vm324, %v693, %v694
    %696 = vrot.lane.b32.xlu0 %v695, 125
    %v697 = vpop.permute.xlu0 %696
    %699 = vmatprep.subr.mxu0 0.0
    %700 = vmatpush1.msra.mxu0 %v697
    %701 = vmatprep.subr.mxu0 0.0
    %702 = vmatpush1.msra.mxu0 0.0
    %703 = vmatprep.subr.mxu0 0.0
    %704 = vmatpush1.msra.mxu0 0.0
    %705 = vmatprep.subr.mxu0 0.0
    %706 = vmatpush1.msra.mxu0 0.0
    %707 = vmatprep.subr.mxu0 0.0
    %708 = vmatpush1.msra.mxu0 0.0
    %709 = vmatprep.subr.mxu0 0.0
    %710 = vmatpush1.msra.mxu0 0.0
    %711 = vmatprep.subr.mxu0 0.0
    %712 = vmatpush1.msra.mxu0 0.0
    %713 = vmatprep.subr.mxu0 0.0
    %714 = vmatpush1.msra.mxu0 0.0
    %715 = vmatprep.subr.mxu0 0.0
    %716 = vmatpush1.msra.mxu0 0.0
    %717 = vmatprep.subr.mxu0 0.0
    %718 = vmatpush1.msra.mxu0 0.0
    %719 = vmatprep.subr.mxu0 0.0
    %720 = vmatpush1.msra.mxu0 0.0
    %721 = vmatprep.subr.mxu0 0.0
    %722 = vmatpush1.msra.mxu0 0.0
    %723 = vmatprep.subr.mxu0 0.0
    %724 = vmatpush1.msra.mxu0 0.0
    %725 = vmatprep.subr.mxu0 0.0
    %726 = vmatpush1.msra.mxu0 0.0
    %727 = vmatprep.subr.mxu0 0.0
    %728 = vmatpush1.msra.mxu0 0.0
    %729 = vmatprep.subr.mxu0 0.0
    %730 = vmatpush1.msra.mxu0 0.0
    %731 = vmatprep.subr.mxu0 0.0
    %732 = vmatpush1.msra.mxu0 0.0
    %733 = vmatprep.subr.mxu0 0.0
    %734 = vmatpush1.msra.mxu0 0.0
    %735 = vmatprep.subr.mxu0 0.0
    %736 = vmatpush1.msra.mxu0 0.0
    %737 = vmatprep.subr.mxu0 0.0
    %738 = vmatpush1.msra.mxu0 0.0
    %739 = vmatprep.subr.mxu0 0.0
    %740 = vmatpush1.msra.mxu0 0.0
    %741 = vmatprep.subr.mxu0 0.0
    %742 = vmatpush1.msra.mxu0 0.0
    %743 = vmatprep.subr.mxu0 0.0
    %744 = vmatpush1.msra.mxu0 0.0
    %745 = vmatprep.subr.mxu0 0.0
    %746 = vmatpush1.msra.mxu0 0.0
    %747 = vmatprep.subr.mxu0 0.0
    %748 = vmatpush1.msra.mxu0 0.0
    %749 = vmatprep.subr.mxu0 0.0
    %750 = vmatpush1.msra.mxu0 0.0
    %751 = vmatprep.subr.mxu0 0.0
    %752 = vmatpush1.msra.mxu0 0.0
    %753 = vmatprep.subr.mxu0 0.0
    %754 = vmatpush1.msra.mxu0 0.0
    %755 = vmatprep.subr.mxu0 0.0
    %756 = vmatpush1.msra.mxu0 0.0
    %757 = vmatprep.subr.mxu0 0.0
    %758 = vmatpush1.msra.mxu0 0.0
    %759 = vmatprep.subr.mxu0 0.0
    %760 = vmatpush1.msra.mxu0 0.0
    %761 = vmatprep.subr.mxu0 0.0
    %762 = vmatpush1.msra.mxu0 0.0
    %763 = vmatprep.mubr.f32.mxu0 0.0
    %764 = vmatmul.mubr.f32.gmra.mrb[0].mxu0 %v333
    %v765 = vpop.f32.mrb[0].mxu0
    %v766 = vadd.f32 0.0, %v765
    %v767 = vpop.f32.mrb[0].mxu0
    %768 = vmatprep.mubr.f32.mxu0 0.0
    %769 = vmatmul.mubr.f32.gmra.mrb[0].mxu0 %v336
    %v770 = vpop.f32.mrb[0].mxu0
    %v771 = vadd.f32 0.0, %v770
    %v772 = vpop.f32.mrb[0].mxu0
    %773 = vmatprep.mubr.f32.mxu0 0.0
    %774 = vmatmul.mubr.f32.gmra.mrb[0].mxu0 %v339
    %v775 = vpop.f32.mrb[0].mxu0
    %v776 = vadd.f32 0.0, %v775
    %v777 = vpop.f32.mrb[0].mxu0
    %778 = vmatprep.mubr.f32.mxu0 0.0
    %779 = vmatmul.mubr.f32.gmra.mrb[0].mxu0 %v342
    %v780 = vpop.f32.mrb[0].mxu0
    %v781 = vadd.f32 0.0, %v780
    %v782 = vpop.f32.mrb[0].mxu0
    %783 = vmatprep.mubr.f32.mxu0 0.0
    %784 = vmatmul.mubr.f32.gmra.mrb[0].mxu0 %v345
    %v785 = vpop.f32.mrb[0].mxu0
    %v786 = vadd.f32 0.0, %v785
    %v787 = vpop.f32.mrb[0].mxu0
    %788 = vmatprep.mubr.f32.mxu0 0.0
    %789 = vmatmul.mubr.f32.gmra.mrb[0].mxu0 %v348
    %v790 = vpop.f32.mrb[0].mxu0
    %v791 = vadd.f32 0.0, %v790
    %v792 = vpop.f32.mrb[0].mxu0
    %793 = vmatprep.mubr.f32.mxu0 0.0
    %794 = vmatmul.mubr.f32.gmra.mrb[0].mxu0 %v351
    %v795 = vpop.f32.mrb[0].mxu0
    %v796 = vadd.f32 0.0, %v795
    %v797 = vpop.f32.mrb[0].mxu0
    %798 = vmatprep.mubr.f32.mxu0 0.0
    %799 = vmatmul.mubr.f32.gmra.mrb[0].mxu0 %v354
    %v800 = vpop.f32.mrb[0].mxu0
    %v801 = vadd.f32 0.0, %v800
    %v802 = vpop.f32.mrb[0].mxu0
    %803 = vmatprep.mubr.f32.mxu0 0.0
    %804 = vmatmul.mubr.f32.gmra.mrb[0].mxu0 %v357
    %v805 = vpop.f32.mrb[0].mxu0
    %v806 = vadd.f32 0.0, %v805
    %v807 = vpop.f32.mrb[0].mxu0
    %808 = vmatprep.mubr.f32.mxu0 0.0
    %809 = vmatmul.mubr.f32.gmra.mrb[0].mxu0 %v360
    %v810 = vpop.f32.mrb[0].mxu0
    %v811 = vadd.f32 0.0, %v810
    %v812 = vpop.f32.mrb[0].mxu0
    %813 = vmatprep.mubr.f32.mxu0 0.0
    %814 = vmatmul.mubr.f32.gmra.mrb[0].mxu0 %v363
    %v815 = vpop.f32.mrb[0].mxu0
    %v816 = vadd.f32 0.0, %v815
    %v817 = vpop.f32.mrb[0].mxu0
    %818 = vdwg.mxu0
    %v819 = vmul.f32 %v683, 256.0
    %v820 = vmul.f32 %v683, 128.0
    %v821 = vadd.f32 %v820, 128.0
    %s823 = vtos %v819
    %v824 = vstv %s823
    %v826 = vmul.f32 %v824, %v766
    %v827 = vmul.f32 %v824, %v771
    %v828 = vmul.f32 %v824, %v776
    %v829 = vmul.f32 %v824, %v781
    %v830 = vmul.f32 %v824, %v786
    %v831 = vmul.f32 %v824, %v791
    %v832 = vmul.f32 %v824, %v796
    %v833 = vmul.f32 %v824, %v801
    %v834 = vmul.f32 %v824, %v806
    %v835 = vmul.f32 %v824, %v811
    %v836 = vmul.f32 %v824, %v816
    %v837 = vlaneseq
    %v838 = vshrl.u32 %v837, 7
    %v839 = vsub.s32 0, %v838
    %v840 = vrot.slane %v821, %v839
    %842 = vrot.lane.b32.xlu0 %v840, 127
    %v843 = vpop.permute.xlu0 %842
    %v845 = vadd.f32 %v826, %v843
    %v846 = vadd.f32 %v827, %v843
    %v847 = vadd.f32 %v828, %v843
    %v848 = vadd.f32 %v829, %v843
    %v849 = vadd.f32 %v830, %v843
    %v850 = vadd.f32 %v831, %v843
    %v851 = vadd.f32 %v832, %v843
    %v852 = vadd.f32 %v833, %v843
    %v853 = vadd.f32 %v834, %v843
    %v854 = vadd.f32 %v835, %v843
    %v855 = vadd.f32 %v836, %v843
    %s856 = scalar_lea.vmem [#allocation5], 88
    %857 = vst.msk [vmem:[%s856] sm:$0x1] %vm522, %v683
    %858 = vst.msk [vmem:[%s856 + $0x1] sm:$0xff] %vm524, %v766
    %859 = vst.msk [vmem:[%s856 + $0x9] sm:$0xff] %vm524, %v771
    %860 = vst.msk [vmem:[%s856 + $0x11] sm:$0xff] %vm524, %v776
    %861 = vst.msk [vmem:[%s856 + $0x19] sm:$0xff] %vm524, %v781
    %862 = vst.msk [vmem:[%s856 + $0x21] sm:$0xff] %vm524, %v786
    %863 = vst.msk [vmem:[%s856 + $0x29] sm:$0xff] %vm524, %v791
    %864 = vst.msk [vmem:[%s856 + $0x31] sm:$0xff] %vm524, %v796
    %865 = vst.msk [vmem:[%s856 + $0x39] sm:$0xff] %vm524, %v801
    %866 = vst.msk [vmem:[%s856 + $0x41] sm:$0xff] %vm524, %v806
    %867 = vst.msk [vmem:[%s856 + $0x49] sm:$0xff] %vm524, %v811
    %868 = vst.msk [vmem:[%s856 + $0x51] sm:$0x3] %vm535, %v816
    %880 = vrot.lane.b32.xlu0 %v845, 3
    %v881 = vpop.permute.xlu0 %880
    %882 = vrot.lane.b32.xlu0 %v846, 3
    %v883 = vpop.permute.xlu0 %882
    %884 = vrot.lane.b32.xlu0 %v847, 3
    %v885 = vpop.permute.xlu0 %884
    %886 = vrot.lane.b32.xlu0 %v848, 3
    %v887 = vpop.permute.xlu0 %886
    %888 = vrot.lane.b32.xlu0 %v849, 3
    %v889 = vpop.permute.xlu0 %888
    %890 = vrot.lane.b32.xlu0 %v850, 3
    %v891 = vpop.permute.xlu0 %890
    %892 = vrot.lane.b32.xlu0 %v851, 3
    %v893 = vpop.permute.xlu0 %892
    %894 = vrot.lane.b32.xlu0 %v852, 3
    %v895 = vpop.permute.xlu0 %894
    %896 = vrot.lane.b32.xlu0 %v853, 3
    %v897 = vpop.permute.xlu0 %896
    %898 = vrot.lane.b32.xlu0 %v854, 3
    %v899 = vpop.permute.xlu0 %898
    %900 = vrot.lane.b32.xlu0 %v855, 3
    %v901 = vpop.permute.xlu0 %900
    %913 = vst.msk [vmem:[%s856 + $0x1] sm:$0xff] %vm581, %v881
    %914 = vst.msk [vmem:[%s856 + $0x9] sm:$0xff] %vm581, %v883
    %915 = vst.msk [vmem:[%s856 + $0x11] sm:$0xff] %vm581, %v885
    %916 = vst.msk [vmem:[%s856 + $0x19] sm:$0xff] %vm581, %v887
    %917 = vst.msk [vmem:[%s856 + $0x21] sm:$0xff] %vm581, %v889
    %918 = vst.msk [vmem:[%s856 + $0x29] sm:$0xff] %vm581, %v891
    %919 = vst.msk [vmem:[%s856 + $0x31] sm:$0xff] %vm581, %v893
    %920 = vst.msk [vmem:[%s856 + $0x39] sm:$0xff] %vm581, %v895
    %921 = vst.msk [vmem:[%s856 + $0x41] sm:$0xff] %vm581, %v897
    %922 = vst.msk [vmem:[%s856 + $0x49] sm:$0xff] %vm581, %v899
    %923 = vst.msk [vmem:[%s856 + $0x51] sm:$0x3] %vm592, %v901
    %v924 = vld [vmem:[#allocation2 + $0x20] sm:$0x1]
    %v925 = vlaneseq
    %v926 = vshrl.u32 %v925, 7
    %v927 = vsub.s32 0, %v926
    %v928 = vrot.slane %v924, %v927
    %v929 = vadd.f32 %v146, %v928
    %931 = vrot.lane.b32.xlu0 %v929, 96
    %v932 = vpop.permute.xlu0 %931
    %v934 = vsel %vm168, %v932, 0.0
    %935 = vadd.xlane.f32.xlu0 %v934
    %v936 = vpop.xlane.xlu0 %935
    %v937 = vmul.f32 %v936, %v172
    %v938 = vsub.f32 %v929, %v937
    %v939 = vmul.f32 %v938, %v938
    %941 = vrot.lane.b32.xlu0 %v939, 96
    %v942 = vpop.permute.xlu0 %941
    %v944 = vsel %vm168, %v942, 0.0
    %945 = vadd.xlane.f32.xlu0 %v944
    %v946 = vpop.xlane.xlu0 %945
    %v947 = vmul.f32 %v946, %v172
    %v948 = vadd.f32 %v947, 1e-06
    %v949 = vrsqrt.pop %v948
    %v950 = vmul.f32 %v938, %v949
    %v951 = vld [vmem:[#allocation2 + $0x21] sm:$0x1]
    %v952 = vlaneseq
    %v953 = vshrl.u32 %v952, 7
    %v954 = vsub.s32 0, %v953
    %v955 = vrot.slane %v951, %v954
    %v956 = vmul.f32 %v950, %v955
    %v957 = vld [vmem:[#allocation2 + $0x22] sm:$0x1]
    %v958 = vlaneseq
    %v959 = vshrl.u32 %v958, 7
    %v960 = vsub.s32 0, %v959
    %v961 = vrot.slane %v957, %v960
    %v962 = vadd.f32 %v956, %v961
    %v963 = vld [vmem:[#allocation2 + $0x20] sm:$0xff]
    %v964 = vlaneseq
    %v965 = vshrl.u32 %v964, 7
    %v966 = vsub.s32 0, %v965
    %v967 = vrot.slane %v962, %v966
    %969 = vrot.lane.b32.xlu0 %v967, 96
    %v970 = vpop.permute.xlu0 %969
    %973 = vrot.lane.b32.xlu0 %v963, 77
    %v974 = vpop.permute.xlu0 %973
    %v976 = vsel %vm203, %v970, %v974
    %v977 = vmul.f32 %v207, %v976
    %v978 = vsel %vm75, %v977, 0.0
    %v979 = vrot.slane %v978, 4
    %v980 = vadd.f32 %v978, %v979
    %v981 = vrot.slane %v980, 2
    %v982 = vadd.f32 %v980, %v981
    %v983 = vrot.slane %v982, 1
    %v984 = vadd.f32 %v982, %v983
    %v986 = vrot.slane %v976, 7
    %v988 = vsel %vm220, %v984, %v986
    %v990 = vsel %vm75, %v988, 0
    %v992 = vsel %vm75, %v986, 0
    %994 = vmatprep.subr.mxu0 0.0
    %995 = vmatpush1.msra.mxu0 %v231
    %996 = vmatprep.subr.mxu0 0.0
    %997 = vmatpush1.msra.mxu0 %v233
    %998 = vmatprep.subr.mxu0 0.0
    %999 = vmatpush1.msra.mxu0 %v235
    %1000 = vmatprep.subr.mxu0 0.0
    %1001 = vmatpush1.msra.mxu0 %v237
    %1002 = vmatprep.subr.mxu0 0.0
    %1003 = vmatpush1.msra.mxu0 0.0
    %1004 = vmatprep.subr.mxu0 0.0
    %1005 = vmatpush1.msra.mxu0 0.0
    %1006 = vmatprep.subr.mxu0 0.0
    %1007 = vmatpush1.msra.mxu0 0.0
    %1008 = vmatprep.subr.mxu0 0.0
    %1009 = vmatpush1.msra.mxu0 0.0
    %1010 = vmatprep.subr.mxu0 0.0
    %1011 = vmatpush1.msra.mxu0 0.0
    %1012 = vmatprep.subr.mxu0 0.0
    %1013 = vmatpush1.msra.mxu0 0.0
    %1014 = vmatprep.subr.mxu0 0.0
    %1015 = vmatpush1.msra.mxu0 0.0
    %1016 = vmatprep.subr.mxu0 0.0
    %1017 = vmatpush1.msra.mxu0 0.0
    %1018 = vmatprep.subr.mxu0 0.0
    %1019 = vmatpush1.msra.mxu0 0.0
    %1020 = vmatprep.subr.mxu0 0.0
    %1021 = vmatpush1.msra.mxu0 0.0
    %1022 = vmatprep.subr.mxu0 0.0
    %1023 = vmatpush1.msra.mxu0 0.0
    %1024 = vmatprep.subr.mxu0 0.0
    %1025 = vmatpush1.msra.mxu0 0.0
    %1026 = vmatprep.subr.mxu0 0.0
    %1027 = vmatpush1.msra.mxu0 0.0
    %1028 = vmatprep.subr.mxu0 0.0
    %1029 = vmatpush1.msra.mxu0 0.0
    %1030 = vmatprep.subr.mxu0 0.0
    %1031 = vmatpush1.msra.mxu0 0.0
    %1032 = vmatprep.subr.mxu0 0.0
    %1033 = vmatpush1.msra.mxu0 0.0
    %1034 = vmatprep.subr.mxu0 0.0
    %1035 = vmatpush1.msra.mxu0 0.0
    %1036 = vmatprep.subr.mxu0 0.0
    %1037 = vmatpush1.msra.mxu0 0.0
    %1038 = vmatprep.subr.mxu0 0.0
    %1039 = vmatpush1.msra.mxu0 0.0
    %1040 = vmatprep.subr.mxu0 0.0
    %1041 = vmatpush1.msra.mxu0 0.0
    %1042 = vmatprep.subr.mxu0 0.0
    %1043 = vmatpush1.msra.mxu0 0.0
    %1044 = vmatprep.subr.mxu0 0.0
    %1045 = vmatpush1.msra.mxu0 0.0
    %1046 = vmatprep.subr.mxu0 0.0
    %1047 = vmatpush1.msra.mxu0 0.0
    %1048 = vmatprep.subr.mxu0 0.0
    %1049 = vmatpush1.msra.mxu0 0.0
    %1050 = vmatprep.subr.mxu0 0.0
    %1051 = vmatpush1.msra.mxu0 0.0
    %1052 = vmatprep.subr.mxu0 0.0
    %1053 = vmatpush1.msra.mxu0 0.0
    %1054 = vmatprep.subr.mxu0 0.0
    %1055 = vmatpush1.msra.mxu0 0.0
    %1056 = vmatprep.subr.mxu0 0.0
    %1057 = vmatpush1.msra.mxu0 0.0
    %1058 = vmatprep.mubr.f32.mxu0 0.0
    %1059 = vmatmul.mubr.f32.gmra.mrb[0].mxu0 %v990
    %v1060 = vpop.f32.mrb[0].mxu0
    %v1061 = vadd.f32 %v225, %v1060
    %v1062 = vpop.f32.mrb[0].mxu0
    %1063 = vmatprep.mubr.f32.mxu0 0.0
    %1064 = vmatmul.mubr.f32.gmra.mrb[0].mxu0 %v992
    %v1065 = vpop.f32.mrb[0].mxu0
    %v1066 = vadd.f32 %v225, %v1065
    %v1067 = vpop.f32.mrb[0].mxu0
    %1068 = vdwg.mxu0
    %v1071 = vrot.slane %v1061, 1
    %v1072 = vrot.slane %v1066, 1
    %v1073 = vsel %vm324, %v1071, %v1072
    %1074 = vrot.lane.b32.xlu0 %v1073, 125
    %v1075 = vpop.permute.xlu0 %1074
    %1077 = vmatprep.subr.mxu0 0.0
    %1078 = vmatpush1.msra.mxu0 %v1075
    %1079 = vmatprep.subr.mxu0 0.0
    %1080 = vmatpush1.msra.mxu0 0.0
    %1081 = vmatprep.subr.mxu0 0.0
    %1082 = vmatpush1.msra.mxu0 0.0
    %1083 = vmatprep.subr.mxu0 0.0
    %1084 = vmatpush1.msra.mxu0 0.0
    %1085 = vmatprep.subr.mxu0 0.0
    %1086 = vmatpush1.msra.mxu0 0.0
    %1087 = vmatprep.subr.mxu0 0.0
    %1088 = vmatpush1.msra.mxu0 0.0
    %1089 = vmatprep.subr.mxu0 0.0
    %1090 = vmatpush1.msra.mxu0 0.0
    %1091 = vmatprep.subr.mxu0 0.0
    %1092 = vmatpush1.msra.mxu0 0.0
    %1093 = vmatprep.subr.mxu0 0.0
    %1094 = vmatpush1.msra.mxu0 0.0
    %1095 = vmatprep.subr.mxu0 0.0
    %1096 = vmatpush1.msra.mxu0 0.0
    %1097 = vmatprep.subr.mxu0 0.0
    %1098 = vmatpush1.msra.mxu0 0.0
    %1099 = vmatprep.subr.mxu0 0.0
    %1100 = vmatpush1.msra.mxu0 0.0
    %1101 = vmatprep.subr.mxu0 0.0
    %1102 = vmatpush1.msra.mxu0 0.0
    %1103 = vmatprep.subr.mxu0 0.0
    %1104 = vmatpush1.msra.mxu0 0.0
    %1105 = vmatprep.subr.mxu0 0.0
    %1106 = vmatpush1.msra.mxu0 0.0
    %1107 = vmatprep.subr.mxu0 0.0
    %1108 = vmatpush1.msra.mxu0 0.0
    %1109 = vmatprep.subr.mxu0 0.0
    %1110 = vmatpush1.msra.mxu0 0.0
    %1111 = vmatprep.subr.mxu0 0.0
    %1112 = vmatpush1.msra.mxu0 0.0
    %1113 = vmatprep.subr.mxu0 0.0
    %1114 = vmatpush1.msra.mxu0 0.0
    %1115 = vmatprep.subr.mxu0 0.0
    %1116 = vmatpush1.msra.mxu0 0.0
    %1117 = vmatprep.subr.mxu0 0.0
    %1118 = vmatpush1.msra.mxu0 0.0
    %1119 = vmatprep.subr.mxu0 0.0
    %1120 = vmatpush1.msra.mxu0 0.0
    %1121 = vmatprep.subr.mxu0 0.0
    %1122 = vmatpush1.msra.mxu0 0.0
    %1123 = vmatprep.subr.mxu0 0.0
    %1124 = vmatpush1.msra.mxu0 0.0
    %1125 = vmatprep.subr.mxu0 0.0
    %1126 = vmatpush1.msra.mxu0 0.0
    %1127 = vmatprep.subr.mxu0 0.0
    %1128 = vmatpush1.msra.mxu0 0.0
    %1129 = vmatprep.subr.mxu0 0.0
    %1130 = vmatpush1.msra.mxu0 0.0
    %1131 = vmatprep.subr.mxu0 0.0
    %1132 = vmatpush1.msra.mxu0 0.0
    %1133 = vmatprep.subr.mxu0 0.0
    %1134 = vmatpush1.msra.mxu0 0.0
    %1135 = vmatprep.subr.mxu0 0.0
    %1136 = vmatpush1.msra.mxu0 0.0
    %1137 = vmatprep.subr.mxu0 0.0
    %1138 = vmatpush1.msra.mxu0 0.0
    %1139 = vmatprep.subr.mxu0 0.0
    %1140 = vmatpush1.msra.mxu0 0.0
    %1141 = vmatprep.mubr.f32.mxu0 0.0
    %1142 = vmatmul.mubr.f32.gmra.mrb[0].mxu0 %v333
    %v1143 = vpop.f32.mrb[0].mxu0
    %v1144 = vadd.f32 0.0, %v1143
    %v1145 = vpop.f32.mrb[0].mxu0
    %1146 = vmatprep.mubr.f32.mxu0 0.0
    %1147 = vmatmul.mubr.f32.gmra.mrb[0].mxu0 %v336
    %v1148 = vpop.f32.mrb[0].mxu0
    %v1149 = vadd.f32 0.0, %v1148
    %v1150 = vpop.f32.mrb[0].mxu0
    %1151 = vmatprep.mubr.f32.mxu0 0.0
    %1152 = vmatmul.mubr.f32.gmra.mrb[0].mxu0 %v339
    %v1153 = vpop.f32.mrb[0].mxu0
    %v1154 = vadd.f32 0.0, %v1153
    %v1155 = vpop.f32.mrb[0].mxu0
    %1156 = vmatprep.mubr.f32.mxu0 0.0
    %1157 = vmatmul.mubr.f32.gmra.mrb[0].mxu0 %v342
    %v1158 = vpop.f32.mrb[0].mxu0
    %v1159 = vadd.f32 0.0, %v1158
    %v1160 = vpop.f32.mrb[0].mxu0
    %1161 = vmatprep.mubr.f32.mxu0 0.0
    %1162 = vmatmul.mubr.f32.gmra.mrb[0].mxu0 %v345
    %v1163 = vpop.f32.mrb[0].mxu0
    %v1164 = vadd.f32 0.0, %v1163
    %v1165 = vpop.f32.mrb[0].mxu0
    %1166 = vmatprep.mubr.f32.mxu0 0.0
    %1167 = vmatmul.mubr.f32.gmra.mrb[0].mxu0 %v348
    %v1168 = vpop.f32.mrb[0].mxu0
    %v1169 = vadd.f32 0.0, %v1168
    %v1170 = vpop.f32.mrb[0].mxu0
    %1171 = vmatprep.mubr.f32.mxu0 0.0
    %1172 = vmatmul.mubr.f32.gmra.mrb[0].mxu0 %v351
    %v1173 = vpop.f32.mrb[0].mxu0
    %v1174 = vadd.f32 0.0, %v1173
    %v1175 = vpop.f32.mrb[0].mxu0
    %1176 = vmatprep.mubr.f32.mxu0 0.0
    %1177 = vmatmul.mubr.f32.gmra.mrb[0].mxu0 %v354
    %v1178 = vpop.f32.mrb[0].mxu0
    %v1179 = vadd.f32 0.0, %v1178
    %v1180 = vpop.f32.mrb[0].mxu0
    %1181 = vmatprep.mubr.f32.mxu0 0.0
    %1182 = vmatmul.mubr.f32.gmra.mrb[0].mxu0 %v357
    %v1183 = vpop.f32.mrb[0].mxu0
    %v1184 = vadd.f32 0.0, %v1183
    %v1185 = vpop.f32.mrb[0].mxu0
    %1186 = vmatprep.mubr.f32.mxu0 0.0
    %1187 = vmatmul.mubr.f32.gmra.mrb[0].mxu0 %v360
    %v1188 = vpop.f32.mrb[0].mxu0
    %v1189 = vadd.f32 0.0, %v1188
    %v1190 = vpop.f32.mrb[0].mxu0
    %1191 = vmatprep.mubr.f32.mxu0 0.0
    %1192 = vmatmul.mubr.f32.gmra.mrb[0].mxu0 %v363
    %v1193 = vpop.f32.mrb[0].mxu0
    %v1194 = vadd.f32 0.0, %v1193
    %v1195 = vpop.f32.mrb[0].mxu0
    %1196 = vdwg.mxu0
    %v1197 = vmul.f32 %v1061, 256.0
    %v1198 = vmul.f32 %v1061, 128.0
    %v1199 = vadd.f32 %v1198, 128.0
    %s1201 = vtos %v1197
    %v1202 = vstv %s1201
    %v1204 = vmul.f32 %v1202, %v1144
    %v1205 = vmul.f32 %v1202, %v1149
    %v1206 = vmul.f32 %v1202, %v1154
    %v1207 = vmul.f32 %v1202, %v1159
    %v1208 = vmul.f32 %v1202, %v1164
    %v1209 = vmul.f32 %v1202, %v1169
    %v1210 = vmul.f32 %v1202, %v1174
    %v1211 = vmul.f32 %v1202, %v1179
    %v1212 = vmul.f32 %v1202, %v1184
    %v1213 = vmul.f32 %v1202, %v1189
    %v1214 = vmul.f32 %v1202, %v1194
    %v1215 = vlaneseq
    %v1216 = vshrl.u32 %v1215, 7
    %v1217 = vsub.s32 0, %v1216
    %v1218 = vrot.slane %v1199, %v1217
    %1220 = vrot.lane.b32.xlu0 %v1218, 127
    %v1221 = vpop.permute.xlu0 %1220
    %v1223 = vadd.f32 %v1204, %v1221
    %v1224 = vadd.f32 %v1205, %v1221
    %v1225 = vadd.f32 %v1206, %v1221
    %v1226 = vadd.f32 %v1207, %v1221
    %v1227 = vadd.f32 %v1208, %v1221
    %v1228 = vadd.f32 %v1209, %v1221
    %v1229 = vadd.f32 %v1210, %v1221
    %v1230 = vadd.f32 %v1211, %v1221
    %v1231 = vadd.f32 %v1212, %v1221
    %v1232 = vadd.f32 %v1213, %v1221
    %v1233 = vadd.f32 %v1214, %v1221
    %s1234 = scalar_lea.vmem [#allocation5], 176
    %1235 = vst.msk [vmem:[%s1234] sm:$0x1] %vm522, %v1061
    %1236 = vst.msk [vmem:[%s1234 + $0x1] sm:$0xff] %vm524, %v1144
    %1237 = vst.msk [vmem:[%s1234 + $0x9] sm:$0xff] %vm524, %v1149
    %1238 = vst.msk [vmem:[%s1234 + $0x11] sm:$0xff] %vm524, %v1154
    %1239 = vst.msk [vmem:[%s1234 + $0x19] sm:$0xff] %vm524, %v1159
    %1240 = vst.msk [vmem:[%s1234 + $0x21] sm:$0xff] %vm524, %v1164
    %1241 = vst.msk [vmem:[%s1234 + $0x29] sm:$0xff] %vm524, %v1169
    %1242 = vst.msk [vmem:[%s1234 + $0x31] sm:$0xff] %vm524, %v1174
    %1243 = vst.msk [vmem:[%s1234 + $0x39] sm:$0xff] %vm524, %v1179
    %1244 = vst.msk [vmem:[%s1234 + $0x41] sm:$0xff] %vm524, %v1184
    %1245 = vst.msk [vmem:[%s1234 + $0x49] sm:$0xff] %vm524, %v1189
    %1246 = vst.msk [vmem:[%s1234 + $0x51] sm:$0x3] %vm535, %v1194
    %1258 = vrot.lane.b32.xlu0 %v1223, 3
    %v1259 = vpop.permute.xlu0 %1258
    %1260 = vrot.lane.b32.xlu0 %v1224, 3
    %v1261 = vpop.permute.xlu0 %1260
    %1262 = vrot.lane.b32.xlu0 %v1225, 3
    %v1263 = vpop.permute.xlu0 %1262
    %1264 = vrot.lane.b32.xlu0 %v1226, 3
    %v1265 = vpop.permute.xlu0 %1264
    %1266 = vrot.lane.b32.xlu0 %v1227, 3
    %v1267 = vpop.permute.xlu0 %1266
    %1268 = vrot.lane.b32.xlu0 %v1228, 3
    %v1269 = vpop.permute.xlu0 %1268
    %1270 = vrot.lane.b32.xlu0 %v1229, 3
    %v1271 = vpop.permute.xlu0 %1270
    %1272 = vrot.lane.b32.xlu0 %v1230, 3
    %v1273 = vpop.permute.xlu0 %1272
    %1274 = vrot.lane.b32.xlu0 %v1231, 3
    %v1275 = vpop.permute.xlu0 %1274
    %1276 = vrot.lane.b32.xlu0 %v1232, 3
    %v1277 = vpop.permute.xlu0 %1276
    %1278 = vrot.lane.b32.xlu0 %v1233, 3
    %v1279 = vpop.permute.xlu0 %1278
    %1291 = vst.msk [vmem:[%s1234 + $0x1] sm:$0xff] %vm581, %v1259
    %1292 = vst.msk [vmem:[%s1234 + $0x9] sm:$0xff] %vm581, %v1261
    %1293 = vst.msk [vmem:[%s1234 + $0x11] sm:$0xff] %vm581, %v1263
    %1294 = vst.msk [vmem:[%s1234 + $0x19] sm:$0xff] %vm581, %v1265
    %1295 = vst.msk [vmem:[%s1234 + $0x21] sm:$0xff] %vm581, %v1267
    %1296 = vst.msk [vmem:[%s1234 + $0x29] sm:$0xff] %vm581, %v1269
    %1297 = vst.msk [vmem:[%s1234 + $0x31] sm:$0xff] %vm581, %v1271
    %1298 = vst.msk [vmem:[%s1234 + $0x39] sm:$0xff] %vm581, %v1273
    %1299 = vst.msk [vmem:[%s1234 + $0x41] sm:$0xff] %vm581, %v1275
    %1300 = vst.msk [vmem:[%s1234 + $0x49] sm:$0xff] %vm581, %v1277
    %1301 = vst.msk [vmem:[%s1234 + $0x51] sm:$0x3] %vm592, %v1279
    %v1302 = vlaneseq
    %v1303 = vshrl.u32 %v1302, 7
    %v1304 = vsub.s32 1, %v1303
    %v1305 = vrot.slane %v962, %v1304
    %1307 = vrot.lane.b32.xlu0 %v1305, 96
    %v1308 = vpop.permute.xlu0 %1307
    %v1310 = vsel %vm203, %v1308, %v974
    %v1311 = vmul.f32 %v207, %v1310
    %v1312 = vsel %vm75, %v1311, 0.0
    %v1313 = vrot.slane %v1312, 4
    %v1314 = vadd.f32 %v1312, %v1313
    %v1315 = vrot.slane %v1314, 2
    %v1316 = vadd.f32 %v1314, %v1315
    %v1317 = vrot.slane %v1316, 1
    %v1318 = vadd.f32 %v1316, %v1317
    %v1320 = vrot.slane %v1310, 7
    %v1322 = vsel %vm220, %v1318, %v1320
    %v1324 = vsel %vm75, %v1322, 0
    %v1326 = vsel %vm75, %v1320, 0
    %1328 = vmatprep.subr.mxu0 0.0
    %1329 = vmatpush1.msra.mxu0 %v231
    %1330 = vmatprep.subr.mxu0 0.0
    %1331 = vmatpush1.msra.mxu0 %v233
    %1332 = vmatprep.subr.mxu0 0.0
    %1333 = vmatpush1.msra.mxu0 %v235
    %1334 = vmatprep.subr.mxu0 0.0
    %1335 = vmatpush1.msra.mxu0 %v237
    %1336 = vmatprep.subr.mxu0 0.0
    %1337 = vmatpush1.msra.mxu0 0.0
    %1338 = vmatprep.subr.mxu0 0.0
    %1339 = vmatpush1.msra.mxu0 0.0
    %1340 = vmatprep.subr.mxu0 0.0
    %1341 = vmatpush1.msra.mxu0 0.0
    %1342 = vmatprep.subr.mxu0 0.0
    %1343 = vmatpush1.msra.mxu0 0.0
    %1344 = vmatprep.subr.mxu0 0.0
    %1345 = vmatpush1.msra.mxu0 0.0
    %1346 = vmatprep.subr.mxu0 0.0
    %1347 = vmatpush1.msra.mxu0 0.0
    %1348 = vmatprep.subr.mxu0 0.0
    %1349 = vmatpush1.msra.mxu0 0.0
    %1350 = vmatprep.subr.mxu0 0.0
    %1351 = vmatpush1.msra.mxu0 0.0
    %1352 = vmatprep.subr.mxu0 0.0
    %1353 = vmatpush1.msra.mxu0 0.0
    %1354 = vmatprep.subr.mxu0 0.0
    %1355 = vmatpush1.msra.mxu0 0.0
    %1356 = vmatprep.subr.mxu0 0.0
    %1357 = vmatpush1.msra.mxu0 0.0
    %1358 = vmatprep.subr.mxu0 0.0
    %1359 = vmatpush1.msra.mxu0 0.0
    %1360 = vmatprep.subr.mxu0 0.0
    %1361 = vmatpush1.msra.mxu0 0.0
    %1362 = vmatprep.subr.mxu0 0.0
    %1363 = vmatpush1.msra.mxu0 0.0
    %1364 = vmatprep.subr.mxu0 0.0
    %1365 = vmatpush1.msra.mxu0 0.0
    %1366 = vmatprep.subr.mxu0 0.0
    %1367 = vmatpush1.msra.mxu0 0.0
    %1368 = vmatprep.subr.mxu0 0.0
    %1369 = vmatpush1.msra.mxu0 0.0
    %1370 = vmatprep.subr.mxu0 0.0
    %1371 = vmatpush1.msra.mxu0 0.0
    %1372 = vmatprep.subr.mxu0 0.0
    %1373 = vmatpush1.msra.mxu0 0.0
    %1374 = vmatprep.subr.mxu0 0.0
    %1375 = vmatpush1.msra.mxu0 0.0
    %1376 = vmatprep.subr.mxu0 0.0
    %1377 = vmatpush1.msra.mxu0 0.0
    %1378 = vmatprep.subr.mxu0 0.0
    %1379 = vmatpush1.msra.mxu0 0.0
    %1380 = vmatprep.subr.mxu0 0.0
    %1381 = vmatpush1.msra.mxu0 0.0
    %1382 = vmatprep.subr.mxu0 0.0
    %1383 = vmatpush1.msra.mxu0 0.0
    %1384 = vmatprep.subr.mxu0 0.0
    %1385 = vmatpush1.msra.mxu0 0.0
    %1386 = vmatprep.subr.mxu0 0.0
    %1387 = vmatpush1.msra.mxu0 0.0
    %1388 = vmatprep.subr.mxu0 0.0
    %1389 = vmatpush1.msra.mxu0 0.0
    %1390 = vmatprep.subr.mxu0 0.0
    %1391 = vmatpush1.msra.mxu0 0.0
    %1392 = vmatprep.mubr.f32.mxu0 0.0
    %1393 = vmatmul.mubr.f32.gmra.mrb[0].mxu0 %v1324
    %v1394 = vpop.f32.mrb[0].mxu0
    %v1395 = vadd.f32 %v225, %v1394
    %v1396 = vpop.f32.mrb[0].mxu0
    %1397 = vmatprep.mubr.f32.mxu0 0.0
    %1398 = vmatmul.mubr.f32.gmra.mrb[0].mxu0 %v1326
    %v1399 = vpop.f32.mrb[0].mxu0
    %v1400 = vadd.f32 %v225, %v1399
    %v1401 = vpop.f32.mrb[0].mxu0
    %1402 = vdwg.mxu0
    %v1405 = vrot.slane %v1395, 1
    %v1406 = vrot.slane %v1400, 1
    %v1407 = vsel %vm324, %v1405, %v1406
    %1408 = vrot.lane.b32.xlu0 %v1407, 125
    %v1409 = vpop.permute.xlu0 %1408
    %1411 = vmatprep.subr.mxu0 0.0
    %1412 = vmatpush1.msra.mxu0 %v1409
    %1413 = vmatprep.subr.mxu0 0.0
    %1414 = vmatpush1.msra.mxu0 0.0
    %1415 = vmatprep.subr.mxu0 0.0
    %1416 = vmatpush1.msra.mxu0 0.0
    %1417 = vmatprep.subr.mxu0 0.0
    %1418 = vmatpush1.msra.mxu0 0.0
    %1419 = vmatprep.subr.mxu0 0.0
    %1420 = vmatpush1.msra.mxu0 0.0
    %1421 = vmatprep.subr.mxu0 0.0
    %1422 = vmatpush1.msra.mxu0 0.0
    %1423 = vmatprep.subr.mxu0 0.0
    %1424 = vmatpush1.msra.mxu0 0.0
    %1425 = vmatprep.subr.mxu0 0.0
    %1426 = vmatpush1.msra.mxu0 0.0
    %1427 = vmatprep.subr.mxu0 0.0
    %1428 = vmatpush1.msra.mxu0 0.0
    %1429 = vmatprep.subr.mxu0 0.0
    %1430 = vmatpush1.msra.mxu0 0.0
    %1431 = vmatprep.subr.mxu0 0.0
    %1432 = vmatpush1.msra.mxu0 0.0
    %1433 = vmatprep.subr.mxu0 0.0
    %1434 = vmatpush1.msra.mxu0 0.0
    %1435 = vmatprep.subr.mxu0 0.0
    %1436 = vmatpush1.msra.mxu0 0.0
    %1437 = vmatprep.subr.mxu0 0.0
    %1438 = vmatpush1.msra.mxu0 0.0
    %1439 = vmatprep.subr.mxu0 0.0
    %1440 = vmatpush1.msra.mxu0 0.0
    %1441 = vmatprep.subr.mxu0 0.0
    %1442 = vmatpush1.msra.mxu0 0.0
    %1443 = vmatprep.subr.mxu0 0.0
    %1444 = vmatpush1.msra.mxu0 0.0
    %1445 = vmatprep.subr.mxu0 0.0
    %1446 = vmatpush1.msra.mxu0 0.0
    %1447 = vmatprep.subr.mxu0 0.0
    %1448 = vmatpush1.msra.mxu0 0.0
    %1449 = vmatprep.subr.mxu0 0.0
    %1450 = vmatpush1.msra.mxu0 0.0
    %1451 = vmatprep.subr.mxu0 0.0
    %1452 = vmatpush1.msra.mxu0 0.0
    %1453 = vmatprep.subr.mxu0 0.0
    %1454 = vmatpush1.msra.mxu0 0.0
    %1455 = vmatprep.subr.mxu0 0.0
    %1456 = vmatpush1.msra.mxu0 0.0
    %1457 = vmatprep.subr.mxu0 0.0
    %1458 = vmatpush1.msra.mxu0 0.0
    %1459 = vmatprep.subr.mxu0 0.0
    %1460 = vmatpush1.msra.mxu0 0.0
    %1461 = vmatprep.subr.mxu0 0.0
    %1462 = vmatpush1.msra.mxu0 0.0
    %1463 = vmatprep.subr.mxu0 0.0
    %1464 = vmatpush1.msra.mxu0 0.0
    %1465 = vmatprep.subr.mxu0 0.0
    %1466 = vmatpush1.msra.mxu0 0.0
    %1467 = vmatprep.subr.mxu0 0.0
    %1468 = vmatpush1.msra.mxu0 0.0
    %1469 = vmatprep.subr.mxu0 0.0
    %1470 = vmatpush1.msra.mxu0 0.0
    %1471 = vmatprep.subr.mxu0 0.0
    %1472 = vmatpush1.msra.mxu0 0.0
    %1473 = vmatprep.subr.mxu0 0.0
    %1474 = vmatpush1.msra.mxu0 0.0
    %1475 = vmatprep.mubr.f32.mxu0 0.0
    %1476 = vmatmul.mubr.f32.gmra.mrb[0].mxu0 %v333
    %v1477 = vpop.f32.mrb[0].mxu0
    %v1478 = vadd.f32 0.0, %v1477
    %v1479 = vpop.f32.mrb[0].mxu0
    %1480 = vmatprep.mubr.f32.mxu0 0.0
    %1481 = vmatmul.mubr.f32.gmra.mrb[0].mxu0 %v336
    %v1482 = vpop.f32.mrb[0].mxu0
    %v1483 = vadd.f32 0.0, %v1482
    %v1484 = vpop.f32.mrb[0].mxu0
    %1485 = vmatprep.mubr.f32.mxu0 0.0
    %1486 = vmatmul.mubr.f32.gmra.mrb[0].mxu0 %v339
    %v1487 = vpop.f32.mrb[0].mxu0
    %v1488 = vadd.f32 0.0, %v1487
    %v1489 = vpop.f32.mrb[0].mxu0
    %1490 = vmatprep.mubr.f32.mxu0 0.0
    %1491 = vmatmul.mubr.f32.gmra.mrb[0].mxu0 %v342
    %v1492 = vpop.f32.mrb[0].mxu0
    %v1493 = vadd.f32 0.0, %v1492
    %v1494 = vpop.f32.mrb[0].mxu0
    %1495 = vmatprep.mubr.f32.mxu0 0.0
    %1496 = vmatmul.mubr.f32.gmra.mrb[0].mxu0 %v345
    %v1497 = vpop.f32.mrb[0].mxu0
    %v1498 = vadd.f32 0.0, %v1497
    %v1499 = vpop.f32.mrb[0].mxu0
    %1500 = vmatprep.mubr.f32.mxu0 0.0
    %1501 = vmatmul.mubr.f32.gmra.mrb[0].mxu0 %v348
    %v1502 = vpop.f32.mrb[0].mxu0
    %v1503 = vadd.f32 0.0, %v1502
    %v1504 = vpop.f32.mrb[0].mxu0
    %1505 = vmatprep.mubr.f32.mxu0 0.0
    %1506 = vmatmul.mubr.f32.gmra.mrb[0].mxu0 %v351
    %v1507 = vpop.f32.mrb[0].mxu0
    %v1508 = vadd.f32 0.0, %v1507
    %v1509 = vpop.f32.mrb[0].mxu0
    %1510 = vmatprep.mubr.f32.mxu0 0.0
    %1511 = vmatmul.mubr.f32.gmra.mrb[0].mxu0 %v354
    %v1512 = vpop.f32.mrb[0].mxu0
    %v1513 = vadd.f32 0.0, %v1512
    %v1514 = vpop.f32.mrb[0].mxu0
    %1515 = vmatprep.mubr.f32.mxu0 0.0
    %1516 = vmatmul.mubr.f32.gmra.mrb[0].mxu0 %v357
    %v1517 = vpop.f32.mrb[0].mxu0
    %v1518 = vadd.f32 0.0, %v1517
    %v1519 = vpop.f32.mrb[0].mxu0
    %1520 = vmatprep.mubr.f32.mxu0 0.0
    %1521 = vmatmul.mubr.f32.gmra.mrb[0].mxu0 %v360
    %v1522 = vpop.f32.mrb[0].mxu0
    %v1523 = vadd.f32 0.0, %v1522
    %v1524 = vpop.f32.mrb[0].mxu0
    %1525 = vmatprep.mubr.f32.mxu0 0.0
    %1526 = vmatmul.mubr.f32.gmra.mrb[0].mxu0 %v363
    %v1527 = vpop.f32.mrb[0].mxu0
    %v1528 = vadd.f32 0.0, %v1527
    %v1529 = vpop.f32.mrb[0].mxu0
    %1530 = vdwg.mxu0
    %v1531 = vmul.f32 %v1395, 256.0
    %v1532 = vmul.f32 %v1395, 128.0
    %v1533 = vadd.f32 %v1532, 128.0
    %s1535 = vtos %v1531
    %v1536 = vstv %s1535
    %v1538 = vmul.f32 %v1536, %v1478
    %v1539 = vmul.f32 %v1536, %v1483
    %v1540 = vmul.f32 %v1536, %v1488
    %v1541 = vmul.f32 %v1536, %v1493
    %v1542 = vmul.f32 %v1536, %v1498
    %v1543 = vmul.f32 %v1536, %v1503
    %v1544 = vmul.f32 %v1536, %v1508
    %v1545 = vmul.f32 %v1536, %v1513
    %v1546 = vmul.f32 %v1536, %v1518
    %v1547 = vmul.f32 %v1536, %v1523
    %v1548 = vmul.f32 %v1536, %v1528
    %v1549 = vlaneseq
    %v1550 = vshrl.u32 %v1549, 7
    %v1551 = vsub.s32 0, %v1550
    %v1552 = vrot.slane %v1533, %v1551
    %1554 = vrot.lane.b32.xlu0 %v1552, 127
    %v1555 = vpop.permute.xlu0 %1554
    %v1557 = vadd.f32 %v1538, %v1555
    %v1558 = vadd.f32 %v1539, %v1555
    %v1559 = vadd.f32 %v1540, %v1555
    %v1560 = vadd.f32 %v1541, %v1555
    %v1561 = vadd.f32 %v1542, %v1555
    %v1562 = vadd.f32 %v1543, %v1555
    %v1563 = vadd.f32 %v1544, %v1555
    %v1564 = vadd.f32 %v1545, %v1555
    %v1565 = vadd.f32 %v1546, %v1555
    %v1566 = vadd.f32 %v1547, %v1555
    %v1567 = vadd.f32 %v1548, %v1555
    %s1568 = scalar_lea.vmem [#allocation5], 264
    %1569 = vst.msk [vmem:[%s1568] sm:$0x1] %vm522, %v1395
    %1570 = vst.msk [vmem:[%s1568 + $0x1] sm:$0xff] %vm524, %v1478
    %1571 = vst.msk [vmem:[%s1568 + $0x9] sm:$0xff] %vm524, %v1483
    %1572 = vst.msk [vmem:[%s1568 + $0x11] sm:$0xff] %vm524, %v1488
    %1573 = vst.msk [vmem:[%s1568 + $0x19] sm:$0xff] %vm524, %v1493
    %1574 = vst.msk [vmem:[%s1568 + $0x21] sm:$0xff] %vm524, %v1498
    %1575 = vst.msk [vmem:[%s1568 + $0x29] sm:$0xff] %vm524, %v1503
    %1576 = vst.msk [vmem:[%s1568 + $0x31] sm:$0xff] %vm524, %v1508
    %1577 = vst.msk [vmem:[%s1568 + $0x39] sm:$0xff] %vm524, %v1513
    %1578 = vst.msk [vmem:[%s1568 + $0x41] sm:$0xff] %vm524, %v1518
    %1579 = vst.msk [vmem:[%s1568 + $0x49] sm:$0xff] %vm524, %v1523
    %1580 = vst.msk [vmem:[%s1568 + $0x51] sm:$0x3] %vm535, %v1528
    %1592 = vrot.lane.b32.xlu0 %v1557, 3
    %v1593 = vpop.permute.xlu0 %1592
    %1594 = vrot.lane.b32.xlu0 %v1558, 3
    %v1595 = vpop.permute.xlu0 %1594
    %1596 = vrot.lane.b32.xlu0 %v1559, 3
    %v1597 = vpop.permute.xlu0 %1596
    %1598 = vrot.lane.b32.xlu0 %v1560, 3
    %v1599 = vpop.permute.xlu0 %1598
    %1600 = vrot.lane.b32.xlu0 %v1561, 3
    %v1601 = vpop.permute.xlu0 %1600
    %1602 = vrot.lane.b32.xlu0 %v1562, 3
    %v1603 = vpop.permute.xlu0 %1602
    %1604 = vrot.lane.b32.xlu0 %v1563, 3
    %v1605 = vpop.permute.xlu0 %1604
    %1606 = vrot.lane.b32.xlu0 %v1564, 3
    %v1607 = vpop.permute.xlu0 %1606
    %1608 = vrot.lane.b32.xlu0 %v1565, 3
    %v1609 = vpop.permute.xlu0 %1608
    %1610 = vrot.lane.b32.xlu0 %v1566, 3
    %v1611 = vpop.permute.xlu0 %1610
    %1612 = vrot.lane.b32.xlu0 %v1567, 3
    %v1613 = vpop.permute.xlu0 %1612
    %1625 = vst.msk [vmem:[%s1568 + $0x1] sm:$0xff] %vm581, %v1593
    %1626 = vst.msk [vmem:[%s1568 + $0x9] sm:$0xff] %vm581, %v1595
    %1627 = vst.msk [vmem:[%s1568 + $0x11] sm:$0xff] %vm581, %v1597
    %1628 = vst.msk [vmem:[%s1568 + $0x19] sm:$0xff] %vm581, %v1599
    %1629 = vst.msk [vmem:[%s1568 + $0x21] sm:$0xff] %vm581, %v1601
    %1630 = vst.msk [vmem:[%s1568 + $0x29] sm:$0xff] %vm581, %v1603
    %1631 = vst.msk [vmem:[%s1568 + $0x31] sm:$0xff] %vm581, %v1605
    %1632 = vst.msk [vmem:[%s1568 + $0x39] sm:$0xff] %vm581, %v1607
    %1633 = vst.msk [vmem:[%s1568 + $0x41] sm:$0xff] %vm581, %v1609
    %1634 = vst.msk [vmem:[%s1568 + $0x49] sm:$0xff] %vm581, %v1611
    %1635 = vst.msk [vmem:[%s1568 + $0x51] sm:$0x3] %vm592, %v1613
    // Predicated region
    $region14: #{tpu_custom_call.1} parent=1 // pred_check
      _
    $region15: #{tpu_custom_call.1} parent=1 // pred_check_branch
      %1637 = sbr.rel (0) target = $region17
    $region16: #{tpu_custom_call.1} parent=1 // pred_region
      %s1639 = ssub.s32 5632, 5632
      %1640 = vsyncadd [#allocation4], %s1639
      %s1641 = sshll.u32 [#allocation5], 4
      %s1642 = int_to_ptr.vmem [resolvable:$true] %s1641
      %1647 = dma.vmem_to_hbm [thread:$0]  %s1642, 5632, %s2, [#allocation4], 128, 128, 8
    $region17: #{tpu_custom_call.1} parent=1 // pred_fallthru
      _
    // Predicated region
    $region18: #{tpu_custom_call.1} parent=1 // pred_check
      _
    $region19: #{tpu_custom_call.1} parent=1 // pred_check_branch
      %1649 = sbr.rel (0) target = $region21
    $region20: #{tpu_custom_call.1} parent=1 // pred_region
      %1650 = dma.done [#allocation4], 5632
    $region21: #{tpu_custom_call.1} parent=1 // pred_fallthru
      _
    %1651 = vsyncpa [#allocation3], 1
    %1652 = vsyncpa [#allocation4], 1

</llo_original>
